<compile_context>
chip_gen: v5e
topology: v5e:2x2
jax: 0.10.0
libtpu: 0.0.40
codegen_flags: <defaults>
</compile_context>

<pallas_src>
import functools

import jax
import jax.numpy as jnp
from jax.experimental import pallas as pl
from jax.experimental.pallas import tpu as pltpu


def _round_up(n, m):
    return ((n + m - 1) // m) * m


# ----------------------------------------------------------------------------
# Kernel: full encoder + decoder chain, VMEM-resident weights, tiled over batch.
# ----------------------------------------------------------------------------
def _autoencoder_kernel(
    x_ref,
    w1_ref, w2_ref, w3_ref, w4_ref, w5_ref, w6_ref,
    b_ref,                       # packed biases: row i = bias of layer i+1
    rec_ref, lat_ref,
    *, l_pad, d, compute_dtype,
):
    def dense(h, w_ref, b, relu):
        # MXU matmul with f32 accumulation; bias/ReLU math stays in f32
        # (v5e has no bf16 VALUs, and it is free everywhere else).
        y = jnp.dot(h.astype(compute_dtype), w_ref[...],
                    preferred_element_type=jnp.float32)
        y = y + b.astype(jnp.float32)
        return jnp.maximum(y, 0.0) if relu else y

    x = x_ref[...]

    # ---------------- encoder ----------------
    h = dense(x, w1_ref, b_ref[0:1, 0:64], True)
    h = dense(h, w2_ref, b_ref[1:2, 0:32], True)
    lat = dense(h, w3_ref, b_ref[2:3, 0:l_pad], False)   # lane-dense padded latent
    lat_ref[...] = lat.astype(lat_ref.dtype)

    # ---------------- decoder ----------------
    h = dense(lat, w4_ref, b_ref[3:4, 0:32], True)
    h = dense(h, w5_ref, b_ref[4:5, 0:64], True)
    rec = dense(h, w6_ref, b_ref[5:6, 0:d], False)
    rec_ref[...] = rec.astype(rec_ref.dtype)


def _pick_block(B, block_b, sub):
    """Pick a batch tile: multiple of the sublane tile, >=4 grid steps when the
    batch allows, preferring a tile that divides B (so no batch padding and no
    extra HBM pass)."""
    if block_b is None:
        target = min(1024, max(sub, _round_up(max(1, B // 4), sub)))
    else:
        target = max(sub, _round_up(block_b, sub))
    target = min(target, _round_up(B, sub))
    blk = target
    lo = max(sub, target - 64 * sub)
    for cand in range(target, lo - 1, -sub):
        if B % cand == 0:
            blk = cand
            break
    return blk


# ----------------------------------------------------------------------------
# Wrapper: unpadded feature dim, resident (padded) weights, batch tiling.
# ----------------------------------------------------------------------------
@functools.partial(jax.jit,
                   static_argnames=("block_b", "compute_dtype", "out_dtype"))
def autoencoder_forward(x, params, *, block_b=None,
                        compute_dtype=jnp.float32, out_dtype=None):
    B, D = x.shape
    L = params["w3"].shape[1]
    L_pad = _round_up(max(L, 1), 128)          # lane-dense latent write
    P = max(128, D, L_pad)                     # packed-bias width

    if out_dtype is None:
        out_dtype = x.dtype

    sub = 16 if jnp.dtype(compute_dtype).itemsize < 4 else 8
    blk = _pick_block(B, block_b, sub)
    B_pad = _round_up(B, blk)
    grid = (B_pad // blk,)

    # x goes in unpadded (no extra HBM pass).  Pad batch rows only if needed.
    x_in = x if B_pad == B else jnp.zeros((B_pad, D), x.dtype).at[:B].set(x)

    # ----- weights: cast to compute dtype; only w3/w4 get (tiny) zero padding
    # so the latent is written lane-dense.  Zero padding keeps the math exact.
    def cast(w):
        return w.astype(compute_dtype)

    def padw(w, rows, cols):
        return jnp.zeros((rows, cols), compute_dtype).at[
            : w.shape[0], : w.shape[1]].set(w.astype(compute_dtype))

    w1 = cast(params["w1"])                    # (D, 64)
    w2 = cast(params["w2"])                    # (64, 32)
    w3 = padw(params["w3"], 32, L_pad)         # (32, L_pad)
    w4 = padw(params["w4"], L_pad, 32)         # (L_pad, 32)
    w5 = cast(params["w5"])                    # (32, 64)
    w6 = cast(params["w6"])                    # (64, D)

    # Pack the six biases into one (8, P) f32 operand (row i = layer i+1 bias).
    bpack = jnp.zeros((8, P), jnp.float32)
    for i, (name, width) in enumerate(
            (("b1", 64), ("b2", 32), ("b3", L), ("b4", 32), ("b5", 64), ("b6", D))):
        bpack = bpack.at[i, :width].set(
            params[name].reshape(-1).astype(jnp.float32))

    # ----- specs -----
    def tile_spec(width):
        return pl.BlockSpec((blk, width), lambda i: (i, 0))

    def resident_spec(shape):
        # Same block every grid step -> stays VMEM-resident across the grid.
        return pl.BlockSpec(shape, lambda i: (0, 0))

    operands = [x_in, w1, w2, w3, w4, w5, w6, bpack]
    in_specs = [tile_spec(D)] + [resident_spec(a.shape) for a in operands[1:]]

    out_shape = (
        jax.ShapeDtypeStruct((B_pad, D), out_dtype),      # reconstruction
        jax.ShapeDtypeStruct((B_pad, L_pad), out_dtype),  # latent (lane-dense)
    )
    out_specs = (tile_spec(D), tile_spec(L_pad))

    # ----- VMEM budget: honest footprint (double-buffered), 32..56 MiB. -----
    item_x = jnp.dtype(x.dtype).itemsize
    item_c = jnp.dtype(compute_dtype).itemsize
    item_o = jnp.dtype(out_dtype).itemsize
    tile_bytes = blk * D * item_x + blk * (D + L_pad) * item_o
    weight_bytes = (w1.size + w2.size + w3.size + w4.size
                    + w5.size + w6.size) * item_c + bpack.size * 4
    vmem_limit = int(min(56 * 1024 * 1024,
                         max(32 * 1024 * 1024,
                             2 * (tile_bytes + weight_bytes) + (8 << 20))))

    # ----- advisory cost estimate so XLA can overlap the custom call -----
    flops = 2 * B_pad * (D * 64 + 64 * 32 + 32 * L + L * 32 + 32 * 64 + 64 * D)
    bytes_accessed = (B_pad * D * (item_x + item_o)
                      + B_pad * L_pad * item_o + weight_bytes)
    cost = pl.CostEstimate(flops=int(flops), transcendentals=0,
                           bytes_accessed=int(bytes_accessed))

    kernel = functools.partial(
        _autoencoder_kernel, l_pad=L_pad, d=D, compute_dtype=compute_dtype)

    rec_p, lat_p = pl.pallas_call(
        kernel,
        out_shape=out_shape,
        grid_spec=pltpu.PrefetchScalarGridSpec(
            num_scalar_prefetch=0,
            grid=grid,
            in_specs=in_specs,
            out_specs=out_specs,
        ),
        compiler_params=pltpu.CompilerParams(
            dimension_semantics=("parallel",),
            vmem_limit_bytes=vmem_limit,
        ),
        cost_estimate=cost,
    )(*operands)

    # Reconstruction is already [B_pad, D]; trim only when batch was padded.
    rec = rec_p if B_pad == B else rec_p[:B]
    # The latent must match the module's [B, L] shape; this slice is tiny
    # (B x 128 elements) compared to the [B, D] streams.
    lat = lat_p[:B, :L]
    return rec, lat


# ----------------------------------------------------------------------------
# Deterministic parameter init (PyTorch-style uniform(-1/sqrt(fan_in), ...)).
# ----------------------------------------------------------------------------
def init_params(key, input_dim, latent_dim, dtype=jnp.float32):
    dims = [
        (input_dim, 64),
        (64, 32),
        (32, latent_dim),
        (latent_dim, 32),
        (32, 64),
        (64, input_dim),
    ]
    params = {}
    for idx, (fan_in, fan_out) in enumerate(dims, start=1):
        key, kw, kb = jax.random.split(key, 3)
        bound = 1.0 / (fan_in ** 0.5)
        params[f"w{idx}"] = jax.random.uniform(
            kw, (fan_in, fan_out), dtype=dtype, minval=-bound, maxval=bound)
        params[f"b{idx}"] = jax.random.uniform(
            kb, (fan_out,), dtype=dtype, minval=-bound, maxval=bound)
    return params


# ----------------------------------------------------------------------------
# Pure-JAX reference for correctness checking.
# ----------------------------------------------------------------------------
def reference_forward(x, p):
    h = jnp.maximum(x @ p["w1"] + p["b1"], 0.0)
    h = jnp.maximum(h @ p["w2"] + p["b2"], 0.0)
    lat = h @ p["w3"] + p["b3"]
    h = jnp.maximum(lat @ p["w4"] + p["b4"], 0.0)
    h = jnp.maximum(h @ p["w5"] + p["b5"], 0.0)
    rec = h @ p["w6"] + p["b6"]
    return rec, lat


if __name__ == "__main__":
    # Module's real feature size (num_points=1000), modest batch.  The auto
    # tile picker chooses blk=64 -> grid=4 (>=2 steps per v7x TensorCore).
    batch = 256
    input_dim = 1000
    latent_dim = 16

    key = jax.random.PRNGKey(0)
    key, kx = jax.random.split(key)
    x = jax.random.normal(kx, (batch, input_dim), dtype=jnp.float32)
    params = init_params(key, input_dim, latent_dim)

    rec_ref, lat_ref = reference_forward(x, params)

    # ---- f32 path (exactness check; no input/output padding on D) ----
    rec, lat = autoencoder_forward(x, params, compute_dtype=jnp.float32)
    rec = jax.block_until_ready(rec)
    lat = jax.block_until_ready(lat)
    assert rec.shape == (batch, input_dim)
    assert lat.shape == (batch, latent_dim)
    assert rec.dtype == jnp.float32
    assert jnp.allclose(rec, rec_ref, atol=2e-3, rtol=2e-3)
    assert jnp.allclose(lat, lat_ref, atol=2e-3, rtol=2e-3)

    # ---- bf16 I/O + compute path: bf16 input stream, bf16 output stream,
    # f32 MXU accumulation and f32 bias/ReLU math inside the kernel. ----
    x_bf = x.astype(jnp.bfloat16)
    rec_bf, lat_bf = autoencoder_forward(x_bf, params,
                                         compute_dtype=jnp.bfloat16,
                                         out_dtype=jnp.bfloat16)
    rec_bf = jax.block_until_ready(rec_bf)
    lat_bf = jax.block_until_ready(lat_bf)
    assert rec_bf.shape == (batch, input_dim)
    assert rec_bf.dtype == jnp.bfloat16
    assert bool(jnp.all(jnp.isfinite(rec_bf.astype(jnp.float32))))
    assert float(jnp.max(jnp.abs(rec_bf.astype(jnp.float32) - rec_ref))) < 0.3
    assert float(jnp.max(jnp.abs(lat_bf.astype(jnp.float32) - lat_ref))) < 0.3

    print("KERNEL_OK")
</pallas_src>

<mosaic_0001>
module attributes {stable_mosaic.version = 11 : i64} {
  func.func @_autoencoder_kernel(%arg0: i32, %arg1: memref<64x1000xf32, #tpu.memory_space<vmem>>, %arg2: memref<1000x64xf32, #tpu.memory_space<vmem>>, %arg3: memref<64x32xf32, #tpu.memory_space<vmem>>, %arg4: memref<32x128xf32, #tpu.memory_space<vmem>>, %arg5: memref<128x32xf32, #tpu.memory_space<vmem>>, %arg6: memref<32x64xf32, #tpu.memory_space<vmem>>, %arg7: memref<64x1000xf32, #tpu.memory_space<vmem>>, %arg8: memref<8x1000xf32, #tpu.memory_space<vmem>>, %arg9: memref<64x1000xf32, #tpu.memory_space<vmem>>, %arg10: memref<64x128xf32, #tpu.memory_space<vmem>>) attributes {dimension_semantics = [#tpu.dimension_semantics<parallel>], iteration_bounds = array<i64: 4>, scalar_prefetch = 0 : i64, scratch_operands = 0 : i64, tpu.core_type = #tpu.core_type<tc>, window_params = [{transform_indices = @transform_0, window_bounds = array<i64: 64, 1000>}, {pipeline_mode = #tpu.pipeline_mode<synchronous>, transform_indices = @transform_1, window_bounds = array<i64: 1000, 64>}, {pipeline_mode = #tpu.pipeline_mode<synchronous>, transform_indices = @transform_2, window_bounds = array<i64: 64, 32>}, {pipeline_mode = #tpu.pipeline_mode<synchronous>, transform_indices = @transform_3, window_bounds = array<i64: 32, 128>}, {pipeline_mode = #tpu.pipeline_mode<synchronous>, transform_indices = @transform_4, window_bounds = array<i64: 128, 32>}, {pipeline_mode = #tpu.pipeline_mode<synchronous>, transform_indices = @transform_5, window_bounds = array<i64: 32, 64>}, {pipeline_mode = #tpu.pipeline_mode<synchronous>, transform_indices = @transform_6, window_bounds = array<i64: 64, 1000>}, {pipeline_mode = #tpu.pipeline_mode<synchronous>, transform_indices = @transform_7, window_bounds = array<i64: 8, 1000>}, {transform_indices = @transform_8, window_bounds = array<i64: 64, 1000>}, {transform_indices = @transform_9, window_bounds = array<i64: 64, 128>}]} {
    %c0 = arith.constant 0 : index
    %c0_0 = arith.constant 0 : index
    %0 = vector.load %arg1[%c0, %c0_0] : memref<64x1000xf32, #tpu.memory_space<vmem>>, vector<64x1000xf32>
    %c0_1 = arith.constant 0 : index
    %c0_2 = arith.constant 0 : index
    %1 = vector.load %arg8[%c0_1, %c0_2] : memref<8x1000xf32, #tpu.memory_space<vmem>>, vector<1x64xf32>
    %c0_3 = arith.constant 0 : index
    %c0_4 = arith.constant 0 : index
    %2 = vector.load %arg2[%c0_3, %c0_4] : memref<1000x64xf32, #tpu.memory_space<vmem>>, vector<1000x64xf32>
    %cst = arith.constant dense<0.000000e+00> : vector<64x64xf32>
    %3 = tpu.matmul %0, %2, %cst {dimension_numbers = #tpu.dot_dimension_numbers<[1], [0], [0], [1], [0, 0, 1, 1], [], []>} : vector<64x1000xf32>, vector<1000x64xf32>, vector<64x64xf32> -> vector<64x64xf32>
    %4 = vector.broadcast %1 : vector<1x64xf32> to vector<64x64xf32>
    %5 = arith.addf %3, %4 : vector<64x64xf32>
    %cst_5 = arith.constant 0.000000e+00 : f32
    %6 = vector.broadcast %cst_5 : f32 to vector<64x64xf32>
    %7 = arith.maximumf %5, %6 : vector<64x64xf32>
    %c1 = arith.constant 1 : index
    %c0_6 = arith.constant 0 : index
    %8 = vector.load %arg8[%c1, %c0_6] : memref<8x1000xf32, #tpu.memory_space<vmem>>, vector<1x32xf32>
    %c0_7 = arith.constant 0 : index
    %c0_8 = arith.constant 0 : index
    %9 = vector.load %arg3[%c0_7, %c0_8] : memref<64x32xf32, #tpu.memory_space<vmem>>, vector<64x32xf32>
    %cst_9 = arith.constant dense<0.000000e+00> : vector<64x32xf32>
    %10 = tpu.matmul %7, %9, %cst_9 {dimension_numbers = #tpu.dot_dimension_numbers<[1], [0], [0], [1], [0, 0, 1, 1], [], []>} : vector<64x64xf32>, vector<64x32xf32>, vector<64x32xf32> -> vector<64x32xf32>
    %11 = vector.broadcast %8 : vector<1x32xf32> to vector<64x32xf32>
    %12 = arith.addf %10, %11 : vector<64x32xf32>
    %cst_10 = arith.constant 0.000000e+00 : f32
    %13 = vector.broadcast %cst_10 : f32 to vector<64x32xf32>
    %14 = arith.maximumf %12, %13 : vector<64x32xf32>
    %c2 = arith.constant 2 : index
    %c0_11 = arith.constant 0 : index
    %15 = vector.load %arg8[%c2, %c0_11] : memref<8x1000xf32, #tpu.memory_space<vmem>>, vector<1x128xf32>
    %c0_12 = arith.constant 0 : index
    %c0_13 = arith.constant 0 : index
    %16 = vector.load %arg4[%c0_12, %c0_13] : memref<32x128xf32, #tpu.memory_space<vmem>>, vector<32x128xf32>
    %cst_14 = arith.constant dense<0.000000e+00> : vector<64x128xf32>
    %17 = tpu.matmul %14, %16, %cst_14 {dimension_numbers = #tpu.dot_dimension_numbers<[1], [0], [0], [1], [0, 0, 1, 1], [], []>} : vector<64x32xf32>, vector<32x128xf32>, vector<64x128xf32> -> vector<64x128xf32>
    %18 = vector.broadcast %15 : vector<1x128xf32> to vector<64x128xf32>
    %19 = arith.addf %17, %18 : vector<64x128xf32>
    %c0_15 = arith.constant 0 : index
    %c0_16 = arith.constant 0 : index
    %20 = vector.load %arg10[%c0_15, %c0_16] : memref<64x128xf32, #tpu.memory_space<vmem>>, vector<64x128xf32>
    tpu.vector_store %arg10[%c0_15, %c0_16], %19 {strides = array<i32>} : memref<64x128xf32, #tpu.memory_space<vmem>>, vector<64x128xf32>,
    %c3 = arith.constant 3 : index
    %c0_17 = arith.constant 0 : index
    %21 = vector.load %arg8[%c3, %c0_17] : memref<8x1000xf32, #tpu.memory_space<vmem>>, vector<1x32xf32>
    %c0_18 = arith.constant 0 : index
    %c0_19 = arith.constant 0 : index
    %22 = vector.load %arg5[%c0_18, %c0_19] : memref<128x32xf32, #tpu.memory_space<vmem>>, vector<128x32xf32>
    %cst_20 = arith.constant dense<0.000000e+00> : vector<64x32xf32>
    %23 = tpu.matmul %19, %22, %cst_20 {dimension_numbers = #tpu.dot_dimension_numbers<[1], [0], [0], [1], [0, 0, 1, 1], [], []>} : vector<64x128xf32>, vector<128x32xf32>, vector<64x32xf32> -> vector<64x32xf32>
    %24 = vector.broadcast %21 : vector<1x32xf32> to vector<64x32xf32>
    %25 = arith.addf %23, %24 : vector<64x32xf32>
    %cst_21 = arith.constant 0.000000e+00 : f32
    %26 = vector.broadcast %cst_21 : f32 to vector<64x32xf32>
    %27 = arith.maximumf %25, %26 : vector<64x32xf32>
    %c4 = arith.constant 4 : index
    %c0_22 = arith.constant 0 : index
    %28 = vector.load %arg8[%c4, %c0_22] : memref<8x1000xf32, #tpu.memory_space<vmem>>, vector<1x64xf32>
    %c0_23 = arith.constant 0 : index
    %c0_24 = arith.constant 0 : index
    %29 = vector.load %arg6[%c0_23, %c0_24] : memref<32x64xf32, #tpu.memory_space<vmem>>, vector<32x64xf32>
    %cst_25 = arith.constant dense<0.000000e+00> : vector<64x64xf32>
    %30 = tpu.matmul %27, %29, %cst_25 {dimension_numbers = #tpu.dot_dimension_numbers<[1], [0], [0], [1], [0, 0, 1, 1], [], []>} : vector<64x32xf32>, vector<32x64xf32>, vector<64x64xf32> -> vector<64x64xf32>
    %31 = vector.broadcast %28 : vector<1x64xf32> to vector<64x64xf32>
    %32 = arith.addf %30, %31 : vector<64x64xf32>
    %cst_26 = arith.constant 0.000000e+00 : f32
    %33 = vector.broadcast %cst_26 : f32 to vector<64x64xf32>
    %34 = arith.maximumf %32, %33 : vector<64x64xf32>
    %c5 = arith.constant 5 : index
    %c0_27 = arith.constant 0 : index
    %35 = vector.load %arg8[%c5, %c0_27] : memref<8x1000xf32, #tpu.memory_space<vmem>>, vector<1x1000xf32>
    %c0_28 = arith.constant 0 : index
    %c0_29 = arith.constant 0 : index
    %36 = vector.load %arg7[%c0_28, %c0_29] : memref<64x1000xf32, #tpu.memory_space<vmem>>, vector<64x1000xf32>
    %cst_30 = arith.constant dense<0.000000e+00> : vector<64x1000xf32>
    %37 = tpu.matmul %34, %36, %cst_30 {dimension_numbers = #tpu.dot_dimension_numbers<[1], [0], [0], [1], [0, 0, 1, 1], [], []>} : vector<64x64xf32>, vector<64x1000xf32>, vector<64x1000xf32> -> vector<64x1000xf32>
    %38 = vector.broadcast %35 : vector<1x1000xf32> to vector<64x1000xf32>
    %39 = arith.addf %37, %38 : vector<64x1000xf32>
    %c0_31 = arith.constant 0 : index
    %c0_32 = arith.constant 0 : index
    %40 = vector.load %arg9[%c0_31, %c0_32] : memref<64x1000xf32, #tpu.memory_space<vmem>>, vector<64x1000xf32>
    tpu.vector_store %arg9[%c0_31, %c0_32], %39 {strides = array<i32>} : memref<64x1000xf32, #tpu.memory_space<vmem>>, vector<64x1000xf32>,
    return
  }
  func.func @transform_0(%arg0: i32) -> (i32, i32) {
    %c0_i32 = arith.constant 0 : i32
    %c0_i32_0 = arith.constant 0 : i32
    return %arg0, %c0_i32 : i32, i32
  }
  func.func @transform_1(%arg0: i32) -> (i32, i32) {
    %c0_i32 = arith.constant 0 : i32
    %c0_i32_0 = arith.constant 0 : i32
    %c0_i32_1 = arith.constant 0 : i32
    return %c0_i32, %c0_i32_0 : i32, i32
  }
  func.func @transform_2(%arg0: i32) -> (i32, i32) {
    %c0_i32 = arith.constant 0 : i32
    %c0_i32_0 = arith.constant 0 : i32
    %c0_i32_1 = arith.constant 0 : i32
    return %c0_i32, %c0_i32_0 : i32, i32
  }
  func.func @transform_3(%arg0: i32) -> (i32, i32) {
    %c0_i32 = arith.constant 0 : i32
    %c0_i32_0 = arith.constant 0 : i32
    %c0_i32_1 = arith.constant 0 : i32
    return %c0_i32, %c0_i32_0 : i32, i32
  }
  func.func @transform_4(%arg0: i32) -> (i32, i32) {
    %c0_i32 = arith.constant 0 : i32
    %c0_i32_0 = arith.constant 0 : i32
    %c0_i32_1 = arith.constant 0 : i32
    return %c0_i32, %c0_i32_0 : i32, i32
  }
  func.func @transform_5(%arg0: i32) -> (i32, i32) {
    %c0_i32 = arith.constant 0 : i32
    %c0_i32_0 = arith.constant 0 : i32
    %c0_i32_1 = arith.constant 0 : i32
    return %c0_i32, %c0_i32_0 : i32, i32
  }
  func.func @transform_6(%arg0: i32) -> (i32, i32) {
    %c0_i32 = arith.constant 0 : i32
    %c0_i32_0 = arith.constant 0 : i32
    %c0_i32_1 = arith.constant 0 : i32
    return %c0_i32, %c0_i32_0 : i32, i32
  }
  func.func @transform_7(%arg0: i32) -> (i32, i32) {
    %c0_i32 = arith.constant 0 : i32
    %c0_i32_0 = arith.constant 0 : i32
    %c0_i32_1 = arith.constant 0 : i32
    return %c0_i32, %c0_i32_0 : i32, i32
  }
  func.func @transform_8(%arg0: i32) -> (i32, i32) {
    %c0_i32 = arith.constant 0 : i32
    %c0_i32_0 = arith.constant 0 : i32
    return %arg0, %c0_i32 : i32, i32
  }
  func.func @transform_9(%arg0: i32) -> (i32, i32) {
    %c0_i32 = arith.constant 0 : i32
    %c0_i32_0 = arith.constant 0 : i32
    return %arg0, %c0_i32 : i32, i32
  }
}

</mosaic_0001>

<llo_original>
// kernel: autoencoder_forward.1
$region0: #{autoencoder_forward.1}
  #allocation0 [shape = 'u32[]', space=smem, size = 0x4, offset = 0x4, fixed_abs, tag = 'smem constant byte address 0x4 - core index']
  #allocation1 [shape = 'u32[72,128]{1,0:T(1,128)}', space=vmem, size = 0x9000, scoped, tag = 'internal scratch']
  %s0 = inlined_call_operand.vmem [shape: f32[256,1000], index: 0, kind: input, shape index: {}]
  %s1 = inlined_call_operand.vmem [shape: f32[1000,64], index: 1, kind: input, shape index: {}]
  %s2 = inlined_call_operand.vmem [shape: f32[64,32], index: 2, kind: input, shape index: {}]
  %s3 = inlined_call_operand.vmem [shape: f32[32,128], index: 3, kind: input, shape index: {}]
  %s4 = inlined_call_operand.vmem [shape: f32[128,32], index: 4, kind: input, shape index: {}]
  %s5 = inlined_call_operand.vmem [shape: f32[32,64], index: 5, kind: input, shape index: {}]
  %s6 = inlined_call_operand.vmem [shape: f32[64,1000], index: 6, kind: input, shape index: {}]
  %s7 = inlined_call_operand.vmem [shape: f32[8,1000], index: 7, kind: input, shape index: {}]
  %s8 = inlined_call_operand.vmem [shape: f32[256,1000], index: 8, kind: output, shape index: {0}]
  %s9 = inlined_call_operand.vmem [shape: f32[256,128], index: 9, kind: output, shape index: {1}]
  %10 = xla_tuple %s8, %s9
  %s11 = sld [smem:[#allocation0]]
  $region73: #{autoencoder_forward.1} parent=0
    _
  %s13 = ssub.s32 1, %s11
  %s14 = scalar_select 0, %s13, %s11
  loop: start=0, step=1, limit=6
  $region2: #{autoencoder_forward.1} parent=0 // loop_pre_header
    _
  $region3: #{autoencoder_forward.1} parent=0 // loop_header
    %s16 = sphi 0, %s20
    %p17 = scmp.ge.s32.totalorder %s16, 6
    %s26 = sphi 0, %s28
    %s29 = sphi 0, %s26
    %s30 = sphi 0, %s29
    %s46 = sphi 0, %s30
    %s50 = sphi 0, %s50
    %s52 = sphi 0, %s50
    %s53 = sphi 0, %s52
    %s67 = sphi 0, %s53
    %s71 = sphi 0, %s71
    %s73 = sphi 0, %s71
    %s74 = sphi 0, %s73
    %s88 = sphi 0, %s74
    %s92 = sphi 0, %s92
    %s94 = sphi 0, %s92
    %s95 = sphi 0, %s94
    %s109 = sphi 0, %s95
    %s113 = sphi 0, %s113
    %s115 = sphi 0, %s113
    %s116 = sphi 0, %s115
    %s130 = sphi 0, %s116
    %s134 = sphi 0, %s134
    %s136 = sphi 0, %s134
    %s137 = sphi 0, %s136
    %s151 = sphi 0, %s137
    %s155 = sphi 0, %s155
    %s157 = sphi 0, %s155
    %s158 = sphi 0, %s157
    %s172 = sphi 0, %s158
    %s176 = sphi 0, %s176
    %s178 = sphi 0, %s176
    %s179 = sphi 0, %s178
    %s193 = sphi 0, %s179
    %s199 = sphi 0, %s201
    %s202 = sphi 0, %s199
    %s203 = sphi 0, %s202
    %s219 = sphi 0, %s203
    %s225 = sphi 0, %s227
    %s228 = sphi 0, %s225
    %s229 = sphi 0, %s228
    %s245 = sphi 0, %s229
  $region4: #{autoencoder_forward.1} parent=0 // loop_header_branch
    %19 = sbr.rel (%p17) target = $region8
  $region5: #{autoencoder_forward.1} parent=0 // loop_body
    %s21 = ssub.s32 %s16, 1
    %s22 = ssub.s32 %s16, 2
    %s23 = sadd.s32 %s16, 1
    %s24 = ssub.s32 %s16, %s23
    %p25 = scmp.eq.s32.totalorder %s24, 0
    %s27 = sadd.s32 %s26, 1
    %s28 = scalar_select %p25, %s26, %s27
    %p31 = pneg %p25
    %p32 = scmp.eq.s32.totalorder %s16, 3
    %p33 = por %p31, %p32
    %p34 = scmp.ne.s32.totalorder %s26, %s29
    %p35 = scmp.eq.s32.totalorder %s16, 0
    %p36 = por %p34, %p35
    %p37 = scmp.ne.s32.totalorder %s26, %s29
    %p38 = scmp.eq.s32.totalorder %s21, 3
    %p39 = por %p37, %p38
    %p40 = scmp.ne.s32.totalorder %s29, %s30
    %p41 = scmp.eq.s32.totalorder %s21, 0
    %p42 = por %p40, %p41
    %p43 = scmp.ne.s32.totalorder %s29, %s30
    %p44 = scmp.eq.s32.totalorder %s22, 3
    %p45 = por %p43, %p44
    %p47 = scmp.ne.s32.totalorder %s30, %s46
    %p48 = scmp.eq.s32.totalorder %s22, 0
    %p49 = por %p47, %p48
    %s51 = sadd.s32 %s50, 1
    %p54 = scmp.eq.s32.totalorder %s16, 3
    %p55 = scmp.ne.s32.totalorder %s50, %s52
    %p56 = scmp.eq.s32.totalorder %s16, 0
    %p57 = por %p55, %p56
    %p58 = scmp.ne.s32.totalorder %s50, %s52
    %p59 = scmp.eq.s32.totalorder %s21, 3
    %p60 = por %p58, %p59
    %p61 = scmp.ne.s32.totalorder %s52, %s53
    %p62 = scmp.eq.s32.totalorder %s21, 0
    %p63 = por %p61, %p62
    %p64 = scmp.ne.s32.totalorder %s52, %s53
    %p65 = scmp.eq.s32.totalorder %s22, 3
    %p66 = por %p64, %p65
    %p68 = scmp.ne.s32.totalorder %s53, %s67
    %p69 = scmp.eq.s32.totalorder %s22, 0
    %p70 = por %p68, %p69
    %s72 = sadd.s32 %s71, 1
    %p75 = scmp.eq.s32.totalorder %s16, 3
    %p76 = scmp.ne.s32.totalorder %s71, %s73
    %p77 = scmp.eq.s32.totalorder %s16, 0
    %p78 = por %p76, %p77
    %p79 = scmp.ne.s32.totalorder %s71, %s73
    %p80 = scmp.eq.s32.totalorder %s21, 3
    %p81 = por %p79, %p80
    %p82 = scmp.ne.s32.totalorder %s73, %s74
    %p83 = scmp.eq.s32.totalorder %s21, 0
    %p84 = por %p82, %p83
    %p85 = scmp.ne.s32.totalorder %s73, %s74
    %p86 = scmp.eq.s32.totalorder %s22, 3
    %p87 = por %p85, %p86
    %p89 = scmp.ne.s32.totalorder %s74, %s88
    %p90 = scmp.eq.s32.totalorder %s22, 0
    %p91 = por %p89, %p90
    %s93 = sadd.s32 %s92, 1
    %p96 = scmp.eq.s32.totalorder %s16, 3
    %p97 = scmp.ne.s32.totalorder %s92, %s94
    %p98 = scmp.eq.s32.totalorder %s16, 0
    %p99 = por %p97, %p98
    %p100 = scmp.ne.s32.totalorder %s92, %s94
    %p101 = scmp.eq.s32.totalorder %s21, 3
    %p102 = por %p100, %p101
    %p103 = scmp.ne.s32.totalorder %s94, %s95
    %p104 = scmp.eq.s32.totalorder %s21, 0
    %p105 = por %p103, %p104
    %p106 = scmp.ne.s32.totalorder %s94, %s95
    %p107 = scmp.eq.s32.totalorder %s22, 3
    %p108 = por %p106, %p107
    %p110 = scmp.ne.s32.totalorder %s95, %s109
    %p111 = scmp.eq.s32.totalorder %s22, 0
    %p112 = por %p110, %p111
    %s114 = sadd.s32 %s113, 1
    %p117 = scmp.eq.s32.totalorder %s16, 3
    %p118 = scmp.ne.s32.totalorder %s113, %s115
    %p119 = scmp.eq.s32.totalorder %s16, 0
    %p120 = por %p118, %p119
    %p121 = scmp.ne.s32.totalorder %s113, %s115
    %p122 = scmp.eq.s32.totalorder %s21, 3
    %p123 = por %p121, %p122
    %p124 = scmp.ne.s32.totalorder %s115, %s116
    %p125 = scmp.eq.s32.totalorder %s21, 0
    %p126 = por %p124, %p125
    %p127 = scmp.ne.s32.totalorder %s115, %s116
    %p128 = scmp.eq.s32.totalorder %s22, 3
    %p129 = por %p127, %p128
    %p131 = scmp.ne.s32.totalorder %s116, %s130
    %p132 = scmp.eq.s32.totalorder %s22, 0
    %p133 = por %p131, %p132
    %s135 = sadd.s32 %s134, 1
    %p138 = scmp.eq.s32.totalorder %s16, 3
    %p139 = scmp.ne.s32.totalorder %s134, %s136
    %p140 = scmp.eq.s32.totalorder %s16, 0
    %p141 = por %p139, %p140
    %p142 = scmp.ne.s32.totalorder %s134, %s136
    %p143 = scmp.eq.s32.totalorder %s21, 3
    %p144 = por %p142, %p143
    %p145 = scmp.ne.s32.totalorder %s136, %s137
    %p146 = scmp.eq.s32.totalorder %s21, 0
    %p147 = por %p145, %p146
    %p148 = scmp.ne.s32.totalorder %s136, %s137
    %p149 = scmp.eq.s32.totalorder %s22, 3
    %p150 = por %p148, %p149
    %p152 = scmp.ne.s32.totalorder %s137, %s151
    %p153 = scmp.eq.s32.totalorder %s22, 0
    %p154 = por %p152, %p153
    %s156 = sadd.s32 %s155, 1
    %p159 = scmp.eq.s32.totalorder %s16, 3
    %p160 = scmp.ne.s32.totalorder %s155, %s157
    %p161 = scmp.eq.s32.totalorder %s16, 0
    %p162 = por %p160, %p161
    %p163 = scmp.ne.s32.totalorder %s155, %s157
    %p164 = scmp.eq.s32.totalorder %s21, 3
    %p165 = por %p163, %p164
    %p166 = scmp.ne.s32.totalorder %s157, %s158
    %p167 = scmp.eq.s32.totalorder %s21, 0
    %p168 = por %p166, %p167
    %p169 = scmp.ne.s32.totalorder %s157, %s158
    %p170 = scmp.eq.s32.totalorder %s22, 3
    %p171 = por %p169, %p170
    %p173 = scmp.ne.s32.totalorder %s158, %s172
    %p174 = scmp.eq.s32.totalorder %s22, 0
    %p175 = por %p173, %p174
    %s177 = sadd.s32 %s176, 1
    %p180 = scmp.eq.s32.totalorder %s16, 3
    %p181 = scmp.ne.s32.totalorder %s176, %s178
    %p182 = scmp.eq.s32.totalorder %s16, 0
    %p183 = por %p181, %p182
    %p184 = scmp.ne.s32.totalorder %s176, %s178
    %p185 = scmp.eq.s32.totalorder %s21, 3
    %p186 = por %p184, %p185
    %p187 = scmp.ne.s32.totalorder %s178, %s179
    %p188 = scmp.eq.s32.totalorder %s21, 0
    %p189 = por %p187, %p188
    %p190 = scmp.ne.s32.totalorder %s178, %s179
    %p191 = scmp.eq.s32.totalorder %s22, 3
    %p192 = por %p190, %p191
    %p194 = scmp.ne.s32.totalorder %s179, %s193
    %p195 = scmp.eq.s32.totalorder %s22, 0
    %p196 = por %p194, %p195
    %s197 = ssub.s32 %s16, %s23
    %p198 = scmp.eq.s32.totalorder %s197, 0
    %s200 = sadd.s32 %s199, 1
    %s201 = scalar_select %p198, %s199, %s200
    %p204 = pneg %p198
    %p205 = scmp.eq.s32.totalorder %s16, 3
    %p206 = por %p204, %p205
    %p207 = scmp.ne.s32.totalorder %s199, %s202
    %p208 = scmp.eq.s32.totalorder %s16, 0
    %p209 = por %p207, %p208
    %p210 = scmp.ne.s32.totalorder %s199, %s202
    %p211 = scmp.eq.s32.totalorder %s21, 3
    %p212 = por %p210, %p211
    %p213 = scmp.ne.s32.totalorder %s202, %s203
    %p214 = scmp.eq.s32.totalorder %s21, 0
    %p215 = por %p213, %p214
    %p216 = scmp.ne.s32.totalorder %s202, %s203
    %p217 = scmp.eq.s32.totalorder %s22, 3
    %p218 = por %p216, %p217
    %p220 = scmp.ne.s32.totalorder %s203, %s219
    %p221 = scmp.eq.s32.totalorder %s22, 0
    %p222 = por %p220, %p221
    %s223 = ssub.s32 %s16, %s23
    %p224 = scmp.eq.s32.totalorder %s223, 0
    %s226 = sadd.s32 %s225, 1
    %s227 = scalar_select %p224, %s225, %s226
    %p230 = pneg %p224
    %p231 = scmp.eq.s32.totalorder %s16, 3
    %p232 = por %p230, %p231
    %p233 = scmp.ne.s32.totalorder %s225, %s228
    %p234 = scmp.eq.s32.totalorder %s16, 0
    %p235 = por %p233, %p234
    %p236 = scmp.ne.s32.totalorder %s225, %s228
    %p237 = scmp.eq.s32.totalorder %s21, 3
    %p238 = por %p236, %p237
    %p239 = scmp.ne.s32.totalorder %s228, %s229
    %p240 = scmp.eq.s32.totalorder %s21, 0
    %p241 = por %p239, %p240
    %p242 = scmp.ne.s32.totalorder %s228, %s229
    %p243 = scmp.eq.s32.totalorder %s22, 3
    %p244 = por %p242, %p243
    %p246 = scmp.ne.s32.totalorder %s229, %s245
    %p247 = scmp.eq.s32.totalorder %s22, 0
    %p248 = por %p246, %p247
    %p249 = scmp.le.s32.totalorder 1, %s16
    %p250 = scmp.lt.s32.totalorder %s16, 5
    %p251 = pnand %p249, %p250
    %p252 = pneg %p251
    // Predicated region
    $region9: #{autoencoder_forward.1} parent=5 // pred_check
      _
    $region10: #{autoencoder_forward.1} parent=5 // pred_check_branch
      %254 = sbr.rel (%p251) target = $region12
    $region11: #{autoencoder_forward.1} parent=5 // pred_region
      %s255 = ssub.s32 %s16, 1
      // Predicated region
      $region13: #{autoencoder_forward.1} parent=11 // pred_check
        %p256 = pneg %p63
      $region14: #{autoencoder_forward.1} parent=11 // pred_check_branch
        %258 = sbr.rel (%p256) target = $region16
      $region15: #{autoencoder_forward.1} parent=11 // pred_region
        _
      $region16: #{autoencoder_forward.1} parent=11 // pred_fallthru
        _
      // Predicated region
      $region17: #{autoencoder_forward.1} parent=11 // pred_check
        %p259 = pneg %p84
      $region18: #{autoencoder_forward.1} parent=11 // pred_check_branch
        %261 = sbr.rel (%p259) target = $region20
      $region19: #{autoencoder_forward.1} parent=11 // pred_region
        _
      $region20: #{autoencoder_forward.1} parent=11 // pred_fallthru
        _
      // Predicated region
      $region21: #{autoencoder_forward.1} parent=11 // pred_check
        %p262 = pneg %p105
      $region22: #{autoencoder_forward.1} parent=11 // pred_check_branch
        %264 = sbr.rel (%p262) target = $region24
      $region23: #{autoencoder_forward.1} parent=11 // pred_region
        _
      $region24: #{autoencoder_forward.1} parent=11 // pred_fallthru
        _
      // Predicated region
      $region25: #{autoencoder_forward.1} parent=11 // pred_check
        %p265 = pneg %p126
      $region26: #{autoencoder_forward.1} parent=11 // pred_check_branch
        %267 = sbr.rel (%p265) target = $region28
      $region27: #{autoencoder_forward.1} parent=11 // pred_region
        _
      $region28: #{autoencoder_forward.1} parent=11 // pred_fallthru
        _
      // Predicated region
      $region29: #{autoencoder_forward.1} parent=11 // pred_check
        %p268 = pneg %p147
      $region30: #{autoencoder_forward.1} parent=11 // pred_check_branch
        %270 = sbr.rel (%p268) target = $region32
      $region31: #{autoencoder_forward.1} parent=11 // pred_region
        _
      $region32: #{autoencoder_forward.1} parent=11 // pred_fallthru
        _
      // Predicated region
      $region33: #{autoencoder_forward.1} parent=11 // pred_check
        %p271 = pneg %p168
      $region34: #{autoencoder_forward.1} parent=11 // pred_check_branch
        %273 = sbr.rel (%p271) target = $region36
      $region35: #{autoencoder_forward.1} parent=11 // pred_region
        _
      $region36: #{autoencoder_forward.1} parent=11 // pred_fallthru
        _
      // Predicated region
      $region37: #{autoencoder_forward.1} parent=11 // pred_check
        %p274 = pneg %p189
      $region38: #{autoencoder_forward.1} parent=11 // pred_check_branch
        %276 = sbr.rel (%p274) target = $region40
      $region39: #{autoencoder_forward.1} parent=11 // pred_region
        _
      $region40: #{autoencoder_forward.1} parent=11 // pred_fallthru
        _
    $region12: #{autoencoder_forward.1} parent=5 // pred_fallthru
      _
    %p277 = scmp.lt.s32.totalorder %s16, 4
    // Predicated region
    $region41: #{autoencoder_forward.1} parent=5 // pred_check
      %p278 = pneg %p277
    $region42: #{autoencoder_forward.1} parent=5 // pred_check_branch
      %280 = sbr.rel (%p278) target = $region44
    $region43: #{autoencoder_forward.1} parent=5 // pred_region
      // Predicated region
      $region45: #{autoencoder_forward.1} parent=43 // pred_check
        %p281 = pneg %p36
      $region46: #{autoencoder_forward.1} parent=43 // pred_check_branch
        %283 = sbr.rel (%p281) target = $region48
      $region47: #{autoencoder_forward.1} parent=43 // pred_region
        %s284 = smul.u32 8, %s16
        %p285 = scmp.lt.s32.totalorder %s284, 31
        %s286 = scalar_select %p285, %s284, 31
        %s287 = smul.addr %s286, 8
        %s288 = smul.addr %s287, 8
        %s289 = scalar_lea.vmem %s0, %s288
        %s290 = smul.u32 8, %s16
      $region48: #{autoencoder_forward.1} parent=43 // pred_fallthru
        _
    $region44: #{autoencoder_forward.1} parent=5 // pred_fallthru
      _
    %p291 = scmp.le.s32.totalorder 1, %s16
    %p292 = scmp.lt.s32.totalorder %s16, 5
    %p293 = pnand %p291, %p292
    %p294 = pneg %p293
    // Predicated region
    $region49: #{autoencoder_forward.1} parent=5 // pred_check
      _
    $region50: #{autoencoder_forward.1} parent=5 // pred_check_branch
      %296 = sbr.rel (%p293) target = $region52
    $region51: #{autoencoder_forward.1} parent=5 // pred_region
      %s297 = ssub.s32 %s16, 1
      %s298 = smul.u32 8, %s21
      %p299 = scmp.lt.s32.totalorder %s298, 31
      %s300 = scalar_select %p299, %s298, 31
      %s301 = smul.addr %s300, 8
      %s302 = smul.addr %s301, 8
      %s303 = scalar_lea.vmem %s0, %s302
      %p304 = pneg %p42
      %p305 = pneg %p39
      %p306 = pneg %p63
      %p307 = pneg %p60
      %p308 = pneg %p84
      %p309 = pneg %p81
      %p310 = pneg %p105
      %p311 = pneg %p102
      %p312 = pneg %p126
      %p313 = pneg %p123
      %p314 = pneg %p147
      %p315 = pneg %p144
      %p316 = pneg %p168
      %p317 = pneg %p165
      %p318 = pneg %p189
      %p319 = pneg %p186
      %p320 = pneg %p215
      %p321 = pneg %p212
      %s322 = smul.u32 8, %s21
      %p323 = scmp.lt.s32.totalorder %s322, 31
      %s324 = scalar_select %p323, %s322, 31
      %s325 = smul.addr %s324, 8
      %s326 = smul.addr %s325, 8
      %s327 = scalar_lea.vmem %s8, %s326
      %p328 = pneg %p241
      %p329 = pneg %p238
      %s330 = smul.u32 8, %s21
      %p331 = scmp.lt.s32.totalorder %s330, 31
      %s332 = scalar_select %p331, %s330, 31
      %s333 = smul.addr %s332, 8
      %s334 = scalar_lea.vmem %s9, %s333
      %s335 = smul.u32 8, %s21
      %p336 = scmp.lt.s32.totalorder %s335, 31
      %s337 = scalar_select %p336, %s335, 31
      %s338 = smul.addr %s337, 8
      %s339 = smul.addr %s338, 8
      %s340 = scalar_lea.vmem %s0, %s339
      %s341 = smul.u32 8, %s21
      %s342 = smul.u32 8, %s21
      %p343 = scmp.lt.s32.totalorder %s342, 31
      %s344 = scalar_select %p343, %s342, 31
      %s345 = smul.addr %s344, 8
      %s346 = smul.addr %s345, 8
      %s347 = scalar_lea.vmem %s8, %s346
      %s348 = smul.u32 8, %s21
      %s349 = smul.u32 8, %s21
      %p350 = scmp.lt.s32.totalorder %s349, 31
      %s351 = scalar_select %p350, %s349, 31
      %s352 = smul.addr %s351, 8
      %s353 = scalar_lea.vmem %s9, %s352
      %s354 = smul.u32 8, %s21
      %v355 = vld [vmem:[%s340] sm:$0xff]
      %v356 = vld [vmem:[%s340 + $0x8] sm:$0xff]
      %v357 = vld [vmem:[%s340 + $0x10] sm:$0xff]
      %v358 = vld [vmem:[%s340 + $0x18] sm:$0xff]
      %v359 = vld [vmem:[%s340 + $0x20] sm:$0xff]
      %v360 = vld [vmem:[%s340 + $0x28] sm:$0xff]
      %v361 = vld [vmem:[%s340 + $0x30] sm:$0xff]
      %v362 = vld [vmem:[%s340 + $0x38] sm:$0xff]
      %v363 = vld [vmem:[%s340 + $0x40] sm:$0xff]
      %v364 = vld [vmem:[%s340 + $0x48] sm:$0xff]
      %v365 = vld [vmem:[%s340 + $0x50] sm:$0xff]
      %v366 = vld [vmem:[%s340 + $0x58] sm:$0xff]
      %v367 = vld [vmem:[%s340 + $0x60] sm:$0xff]
      %v368 = vld [vmem:[%s340 + $0x68] sm:$0xff]
      %v369 = vld [vmem:[%s340 + $0x70] sm:$0xff]
      %v370 = vld [vmem:[%s340 + $0x78] sm:$0xff]
      %v371 = vld [vmem:[%s340 + $0x80] sm:$0xff]
      %v372 = vld [vmem:[%s340 + $0x88] sm:$0xff]
      %v373 = vld [vmem:[%s340 + $0x90] sm:$0xff]
      %v374 = vld [vmem:[%s340 + $0x98] sm:$0xff]
      %v375 = vld [vmem:[%s340 + $0xa0] sm:$0xff]
      %v376 = vld [vmem:[%s340 + $0xa8] sm:$0xff]
      %v377 = vld [vmem:[%s340 + $0xb0] sm:$0xff]
      %v378 = vld [vmem:[%s340 + $0xb8] sm:$0xff]
      %v379 = vld [vmem:[%s340 + $0xc0] sm:$0xff]
      %v380 = vld [vmem:[%s340 + $0xc8] sm:$0xff]
      %v381 = vld [vmem:[%s340 + $0xd0] sm:$0xff]
      %v382 = vld [vmem:[%s340 + $0xd8] sm:$0xff]
      %v383 = vld [vmem:[%s340 + $0xe0] sm:$0xff]
      %v384 = vld [vmem:[%s340 + $0xe8] sm:$0xff]
      %v385 = vld [vmem:[%s340 + $0xf0] sm:$0xff]
      %v386 = vld [vmem:[%s340 + $0xf8] sm:$0xff]
      %v387 = vld [vmem:[%s340 + $0x100] sm:$0xff]
      %v388 = vld [vmem:[%s340 + $0x108] sm:$0xff]
      %v389 = vld [vmem:[%s340 + $0x110] sm:$0xff]
      %v390 = vld [vmem:[%s340 + $0x118] sm:$0xff]
      %v391 = vld [vmem:[%s340 + $0x120] sm:$0xff]
      %v392 = vld [vmem:[%s340 + $0x128] sm:$0xff]
      %v393 = vld [vmem:[%s340 + $0x130] sm:$0xff]
      %v394 = vld [vmem:[%s340 + $0x138] sm:$0xff]
      %v395 = vld [vmem:[%s340 + $0x140] sm:$0xff]
      %v396 = vld [vmem:[%s340 + $0x148] sm:$0xff]
      %v397 = vld [vmem:[%s340 + $0x150] sm:$0xff]
      %v398 = vld [vmem:[%s340 + $0x158] sm:$0xff]
      %v399 = vld [vmem:[%s340 + $0x160] sm:$0xff]
      %v400 = vld [vmem:[%s340 + $0x168] sm:$0xff]
      %v401 = vld [vmem:[%s340 + $0x170] sm:$0xff]
      %v402 = vld [vmem:[%s340 + $0x178] sm:$0xff]
      %v403 = vld [vmem:[%s340 + $0x180] sm:$0xff]
      %v404 = vld [vmem:[%s340 + $0x188] sm:$0xff]
      %v405 = vld [vmem:[%s340 + $0x190] sm:$0xff]
      %v406 = vld [vmem:[%s340 + $0x198] sm:$0xff]
      %v407 = vld [vmem:[%s340 + $0x1a0] sm:$0xff]
      %v408 = vld [vmem:[%s340 + $0x1a8] sm:$0xff]
      %v409 = vld [vmem:[%s340 + $0x1b0] sm:$0xff]
      %v410 = vld [vmem:[%s340 + $0x1b8] sm:$0xff]
      %v411 = vld [vmem:[%s340 + $0x1c0] sm:$0xff]
      %v412 = vld [vmem:[%s340 + $0x1c8] sm:$0xff]
      %v413 = vld [vmem:[%s340 + $0x1d0] sm:$0xff]
      %v414 = vld [vmem:[%s340 + $0x1d8] sm:$0xff]
      %v415 = vld [vmem:[%s340 + $0x1e0] sm:$0xff]
      %v416 = vld [vmem:[%s340 + $0x1e8] sm:$0xff]
      %v417 = vld [vmem:[%s340 + $0x1f0] sm:$0xff]
      %v418 = vld [vmem:[%s340 + $0x1f8] sm:$0xff]
      %v419 = vld [vmem:[%s7] ss:$0 sm:$0xff]
      %v420 = vld [vmem:[%s1] sm:$0xff]
      %v421 = vld [vmem:[%s1 + $0x8] sm:$0xff]
      %v422 = vld [vmem:[%s1 + $0x10] sm:$0xff]
      %v423 = vld [vmem:[%s1 + $0x18] sm:$0xff]
      %v424 = vld [vmem:[%s1 + $0x20] sm:$0xff]
      %v425 = vld [vmem:[%s1 + $0x28] sm:$0xff]
      %v426 = vld [vmem:[%s1 + $0x30] sm:$0xff]
      %v427 = vld [vmem:[%s1 + $0x38] sm:$0xff]
      %v428 = vld [vmem:[%s1 + $0x40] sm:$0xff]
      %v429 = vld [vmem:[%s1 + $0x48] sm:$0xff]
      %v430 = vld [vmem:[%s1 + $0x50] sm:$0xff]
      %v431 = vld [vmem:[%s1 + $0x58] sm:$0xff]
      %v432 = vld [vmem:[%s1 + $0x60] sm:$0xff]
      %v433 = vld [vmem:[%s1 + $0x68] sm:$0xff]
      %v434 = vld [vmem:[%s1 + $0x70] sm:$0xff]
      %v435 = vld [vmem:[%s1 + $0x78] sm:$0xff]
      %v436 = vld [vmem:[%s1 + $0x80] sm:$0xff]
      %v437 = vld [vmem:[%s1 + $0x88] sm:$0xff]
      %v438 = vld [vmem:[%s1 + $0x90] sm:$0xff]
      %v439 = vld [vmem:[%s1 + $0x98] sm:$0xff]
      %v440 = vld [vmem:[%s1 + $0xa0] sm:$0xff]
      %v441 = vld [vmem:[%s1 + $0xa8] sm:$0xff]
      %v442 = vld [vmem:[%s1 + $0xb0] sm:$0xff]
      %v443 = vld [vmem:[%s1 + $0xb8] sm:$0xff]
      %v444 = vld [vmem:[%s1 + $0xc0] sm:$0xff]
      %v445 = vld [vmem:[%s1 + $0xc8] sm:$0xff]
      %v446 = vld [vmem:[%s1 + $0xd0] sm:$0xff]
      %v447 = vld [vmem:[%s1 + $0xd8] sm:$0xff]
      %v448 = vld [vmem:[%s1 + $0xe0] sm:$0xff]
      %v449 = vld [vmem:[%s1 + $0xe8] sm:$0xff]
      %v450 = vld [vmem:[%s1 + $0xf0] sm:$0xff]
      %v451 = vld [vmem:[%s1 + $0xf8] sm:$0xff]
      %v452 = vld [vmem:[%s1 + $0x100] sm:$0xff]
      %v453 = vld [vmem:[%s1 + $0x108] sm:$0xff]
      %v454 = vld [vmem:[%s1 + $0x110] sm:$0xff]
      %v455 = vld [vmem:[%s1 + $0x118] sm:$0xff]
      %v456 = vld [vmem:[%s1 + $0x120] sm:$0xff]
      %v457 = vld [vmem:[%s1 + $0x128] sm:$0xff]
      %v458 = vld [vmem:[%s1 + $0x130] sm:$0xff]
      %v459 = vld [vmem:[%s1 + $0x138] sm:$0xff]
      %v460 = vld [vmem:[%s1 + $0x140] sm:$0xff]
      %v461 = vld [vmem:[%s1 + $0x148] sm:$0xff]
      %v462 = vld [vmem:[%s1 + $0x150] sm:$0xff]
      %v463 = vld [vmem:[%s1 + $0x158] sm:$0xff]
      %v464 = vld [vmem:[%s1 + $0x160] sm:$0xff]
      %v465 = vld [vmem:[%s1 + $0x168] sm:$0xff]
      %v466 = vld [vmem:[%s1 + $0x170] sm:$0xff]
      %v467 = vld [vmem:[%s1 + $0x178] sm:$0xff]
      %v468 = vld [vmem:[%s1 + $0x180] sm:$0xff]
      %v469 = vld [vmem:[%s1 + $0x188] sm:$0xff]
      %v470 = vld [vmem:[%s1 + $0x190] sm:$0xff]
      %v471 = vld [vmem:[%s1 + $0x198] sm:$0xff]
      %v472 = vld [vmem:[%s1 + $0x1a0] sm:$0xff]
      %v473 = vld [vmem:[%s1 + $0x1a8] sm:$0xff]
      %v474 = vld [vmem:[%s1 + $0x1b0] sm:$0xff]
      %v475 = vld [vmem:[%s1 + $0x1b8] sm:$0xff]
      %v476 = vld [vmem:[%s1 + $0x1c0] sm:$0xff]
      %v477 = vld [vmem:[%s1 + $0x1c8] sm:$0xff]
      %v478 = vld [vmem:[%s1 + $0x1d0] sm:$0xff]
      %v479 = vld [vmem:[%s1 + $0x1d8] sm:$0xff]
      %v480 = vld [vmem:[%s1 + $0x1e0] sm:$0xff]
      %v481 = vld [vmem:[%s1 + $0x1e8] sm:$0xff]
      %v482 = vld [vmem:[%s1 + $0x1f0] sm:$0xff]
      %v483 = vld [vmem:[%s1 + $0x1f8] sm:$0xff]
      %v484 = vld [vmem:[%s1 + $0x200] sm:$0xff]
      %v485 = vld [vmem:[%s1 + $0x208] sm:$0xff]
      %v486 = vld [vmem:[%s1 + $0x210] sm:$0xff]
      %v487 = vld [vmem:[%s1 + $0x218] sm:$0xff]
      %v488 = vld [vmem:[%s1 + $0x220] sm:$0xff]
      %v489 = vld [vmem:[%s1 + $0x228] sm:$0xff]
      %v490 = vld [vmem:[%s1 + $0x230] sm:$0xff]
      %v491 = vld [vmem:[%s1 + $0x238] sm:$0xff]
      %v492 = vld [vmem:[%s1 + $0x240] sm:$0xff]
      %v493 = vld [vmem:[%s1 + $0x248] sm:$0xff]
      %v494 = vld [vmem:[%s1 + $0x250] sm:$0xff]
      %v495 = vld [vmem:[%s1 + $0x258] sm:$0xff]
      %v496 = vld [vmem:[%s1 + $0x260] sm:$0xff]
      %v497 = vld [vmem:[%s1 + $0x268] sm:$0xff]
      %v498 = vld [vmem:[%s1 + $0x270] sm:$0xff]
      %v499 = vld [vmem:[%s1 + $0x278] sm:$0xff]
      %v500 = vld [vmem:[%s1 + $0x280] sm:$0xff]
      %v501 = vld [vmem:[%s1 + $0x288] sm:$0xff]
      %v502 = vld [vmem:[%s1 + $0x290] sm:$0xff]
      %v503 = vld [vmem:[%s1 + $0x298] sm:$0xff]
      %v504 = vld [vmem:[%s1 + $0x2a0] sm:$0xff]
      %v505 = vld [vmem:[%s1 + $0x2a8] sm:$0xff]
      %v506 = vld [vmem:[%s1 + $0x2b0] sm:$0xff]
      %v507 = vld [vmem:[%s1 + $0x2b8] sm:$0xff]
      %v508 = vld [vmem:[%s1 + $0x2c0] sm:$0xff]
      %v509 = vld [vmem:[%s1 + $0x2c8] sm:$0xff]
      %v510 = vld [vmem:[%s1 + $0x2d0] sm:$0xff]
      %v511 = vld [vmem:[%s1 + $0x2d8] sm:$0xff]
      %v512 = vld [vmem:[%s1 + $0x2e0] sm:$0xff]
      %v513 = vld [vmem:[%s1 + $0x2e8] sm:$0xff]
      %v514 = vld [vmem:[%s1 + $0x2f0] sm:$0xff]
      %v515 = vld [vmem:[%s1 + $0x2f8] sm:$0xff]
      %v516 = vld [vmem:[%s1 + $0x300] sm:$0xff]
      %v517 = vld [vmem:[%s1 + $0x308] sm:$0xff]
      %v518 = vld [vmem:[%s1 + $0x310] sm:$0xff]
      %v519 = vld [vmem:[%s1 + $0x318] sm:$0xff]
      %v520 = vld [vmem:[%s1 + $0x320] sm:$0xff]
      %v521 = vld [vmem:[%s1 + $0x328] sm:$0xff]
      %v522 = vld [vmem:[%s1 + $0x330] sm:$0xff]
      %v523 = vld [vmem:[%s1 + $0x338] sm:$0xff]
      %v524 = vld [vmem:[%s1 + $0x340] sm:$0xff]
      %v525 = vld [vmem:[%s1 + $0x348] sm:$0xff]
      %v526 = vld [vmem:[%s1 + $0x350] sm:$0xff]
      %v527 = vld [vmem:[%s1 + $0x358] sm:$0xff]
      %v528 = vld [vmem:[%s1 + $0x360] sm:$0xff]
      %v529 = vld [vmem:[%s1 + $0x368] sm:$0xff]
      %v530 = vld [vmem:[%s1 + $0x370] sm:$0xff]
      %v531 = vld [vmem:[%s1 + $0x378] sm:$0xff]
      %v532 = vld [vmem:[%s1 + $0x380] sm:$0xff]
      %v533 = vld [vmem:[%s1 + $0x388] sm:$0xff]
      %v534 = vld [vmem:[%s1 + $0x390] sm:$0xff]
      %v535 = vld [vmem:[%s1 + $0x398] sm:$0xff]
      %v536 = vld [vmem:[%s1 + $0x3a0] sm:$0xff]
      %v537 = vld [vmem:[%s1 + $0x3a8] sm:$0xff]
      %v538 = vld [vmem:[%s1 + $0x3b0] sm:$0xff]
      %v539 = vld [vmem:[%s1 + $0x3b8] sm:$0xff]
      %v540 = vld [vmem:[%s1 + $0x3c0] sm:$0xff]
      %v541 = vld [vmem:[%s1 + $0x3c8] sm:$0xff]
      %v542 = vld [vmem:[%s1 + $0x3d0] sm:$0xff]
      %v543 = vld [vmem:[%s1 + $0x3d8] sm:$0xff]
      %v544 = vld [vmem:[%s1 + $0x3e0] sm:$0xff]
      %vm545 = vcmask 850944
      %v547 = vsel %vm545, %v362, 0
      %v550 = vsel %vm545, %v370, 0
      %v553 = vsel %vm545, %v378, 0
      %v556 = vsel %vm545, %v386, 0
      %v559 = vsel %vm545, %v394, 0
      %v562 = vsel %vm545, %v402, 0
      %v565 = vsel %vm545, %v410, 0
      %v568 = vsel %vm545, %v418, 0
      %570 = vmatpush.msra.mxu0 %v435
      %571 = vmatpush.msra.mxu0 %v434
      %572 = vmatpush.msra.mxu0 %v433
      %573 = vmatpush.msra.mxu0 %v432
      %574 = vmatpush.msra.mxu0 %v431
      %575 = vmatpush.msra.mxu0 %v430
      %576 = vmatpush.msra.mxu0 %v429
      %577 = vmatpush.msra.mxu0 %v428
      %578 = vmatpush.msra.mxu0 %v427
      %579 = vmatpush.msra.mxu0 %v426
      %580 = vmatpush.msra.mxu0 %v425
      %581 = vmatpush.msra.mxu0 %v424
      %582 = vmatpush.msra.mxu0 %v423
      %583 = vmatpush.msra.mxu0 %v422
      %584 = vmatpush.msra.mxu0 %v421
      %585 = vmatpush.msra.mxu0 %v420
      %586 = vmatmul.f32.gmra.mxu0 %v355
      %v587 = vpop.f32.mrf.mxu0
      %v588 = vadd.f32 %v419, %v587
      %589 = vmatmul.f32.gmra.mxu0 %v363
      %v590 = vpop.f32.mrf.mxu0
      %v591 = vadd.f32 %v419, %v590
      %592 = vmatmul.f32.gmra.mxu0 %v371
      %v593 = vpop.f32.mrf.mxu0
      %v594 = vadd.f32 %v419, %v593
      %595 = vmatmul.f32.gmra.mxu0 %v379
      %v596 = vpop.f32.mrf.mxu0
      %v597 = vadd.f32 %v419, %v596
      %598 = vmatmul.f32.gmra.mxu0 %v387
      %v599 = vpop.f32.mrf.mxu0
      %v600 = vadd.f32 %v419, %v599
      %601 = vmatmul.f32.gmra.mxu0 %v395
      %v602 = vpop.f32.mrf.mxu0
      %v603 = vadd.f32 %v419, %v602
      %604 = vmatmul.f32.gmra.mxu0 %v403
      %v605 = vpop.f32.mrf.mxu0
      %v606 = vadd.f32 %v419, %v605
      %607 = vmatmul.f32.gmra.mxu0 %v411
      %v608 = vpop.f32.mrf.mxu0
      %v609 = vadd.f32 %v419, %v608
      %610 = vdwg.mxu0
      %611 = vmatpush.msra.mxu0 %v451
      %612 = vmatpush.msra.mxu0 %v450
      %613 = vmatpush.msra.mxu0 %v449
      %614 = vmatpush.msra.mxu0 %v448
      %615 = vmatpush.msra.mxu0 %v447
      %616 = vmatpush.msra.mxu0 %v446
      %617 = vmatpush.msra.mxu0 %v445
      %618 = vmatpush.msra.mxu0 %v444
      %619 = vmatpush.msra.mxu0 %v443
      %620 = vmatpush.msra.mxu0 %v442
      %621 = vmatpush.msra.mxu0 %v441
      %622 = vmatpush.msra.mxu0 %v440
      %623 = vmatpush.msra.mxu0 %v439
      %624 = vmatpush.msra.mxu0 %v438
      %625 = vmatpush.msra.mxu0 %v437
      %626 = vmatpush.msra.mxu0 %v436
      %627 = vmatmul.f32.gmra.mxu0 %v356
      %v628 = vpop.f32.mrf.mxu0
      %v629 = vadd.f32 %v588, %v628
      %630 = vmatmul.f32.gmra.mxu0 %v364
      %v631 = vpop.f32.mrf.mxu0
      %v632 = vadd.f32 %v591, %v631
      %633 = vmatmul.f32.gmra.mxu0 %v372
      %v634 = vpop.f32.mrf.mxu0
      %v635 = vadd.f32 %v594, %v634
      %636 = vmatmul.f32.gmra.mxu0 %v380
      %v637 = vpop.f32.mrf.mxu0
      %v638 = vadd.f32 %v597, %v637
      %639 = vmatmul.f32.gmra.mxu0 %v388
      %v640 = vpop.f32.mrf.mxu0
      %v641 = vadd.f32 %v600, %v640
      %642 = vmatmul.f32.gmra.mxu0 %v396
      %v643 = vpop.f32.mrf.mxu0
      %v644 = vadd.f32 %v603, %v643
      %645 = vmatmul.f32.gmra.mxu0 %v404
      %v646 = vpop.f32.mrf.mxu0
      %v647 = vadd.f32 %v606, %v646
      %648 = vmatmul.f32.gmra.mxu0 %v412
      %v649 = vpop.f32.mrf.mxu0
      %v650 = vadd.f32 %v609, %v649
      %651 = vdwg.mxu0
      %652 = vmatpush.msra.mxu0 %v467
      %653 = vmatpush.msra.mxu0 %v466
      %654 = vmatpush.msra.mxu0 %v465
      %655 = vmatpush.msra.mxu0 %v464
      %656 = vmatpush.msra.mxu0 %v463
      %657 = vmatpush.msra.mxu0 %v462
      %658 = vmatpush.msra.mxu0 %v461
      %659 = vmatpush.msra.mxu0 %v460
      %660 = vmatpush.msra.mxu0 %v459
      %661 = vmatpush.msra.mxu0 %v458
      %662 = vmatpush.msra.mxu0 %v457
      %663 = vmatpush.msra.mxu0 %v456
      %664 = vmatpush.msra.mxu0 %v455
      %665 = vmatpush.msra.mxu0 %v454
      %666 = vmatpush.msra.mxu0 %v453
      %667 = vmatpush.msra.mxu0 %v452
      %668 = vmatmul.f32.gmra.mxu0 %v357
      %v669 = vpop.f32.mrf.mxu0
      %v670 = vadd.f32 %v629, %v669
      %671 = vmatmul.f32.gmra.mxu0 %v365
      %v672 = vpop.f32.mrf.mxu0
      %v673 = vadd.f32 %v632, %v672
      %674 = vmatmul.f32.gmra.mxu0 %v373
      %v675 = vpop.f32.mrf.mxu0
      %v676 = vadd.f32 %v635, %v675
      %677 = vmatmul.f32.gmra.mxu0 %v381
      %v678 = vpop.f32.mrf.mxu0
      %v679 = vadd.f32 %v638, %v678
      %680 = vmatmul.f32.gmra.mxu0 %v389
      %v681 = vpop.f32.mrf.mxu0
      %v682 = vadd.f32 %v641, %v681
      %683 = vmatmul.f32.gmra.mxu0 %v397
      %v684 = vpop.f32.mrf.mxu0
      %v685 = vadd.f32 %v644, %v684
      %686 = vmatmul.f32.gmra.mxu0 %v405
      %v687 = vpop.f32.mrf.mxu0
      %v688 = vadd.f32 %v647, %v687
      %689 = vmatmul.f32.gmra.mxu0 %v413
      %v690 = vpop.f32.mrf.mxu0
      %v691 = vadd.f32 %v650, %v690
      %692 = vdwg.mxu0
      %693 = vmatpush.msra.mxu0 %v483
      %694 = vmatpush.msra.mxu0 %v482
      %695 = vmatpush.msra.mxu0 %v481
      %696 = vmatpush.msra.mxu0 %v480
      %697 = vmatpush.msra.mxu0 %v479
      %698 = vmatpush.msra.mxu0 %v478
      %699 = vmatpush.msra.mxu0 %v477
      %700 = vmatpush.msra.mxu0 %v476
      %701 = vmatpush.msra.mxu0 %v475
      %702 = vmatpush.msra.mxu0 %v474
      %703 = vmatpush.msra.mxu0 %v473
      %704 = vmatpush.msra.mxu0 %v472
      %705 = vmatpush.msra.mxu0 %v471
      %706 = vmatpush.msra.mxu0 %v470
      %707 = vmatpush.msra.mxu0 %v469
      %708 = vmatpush.msra.mxu0 %v468
      %709 = vmatmul.f32.gmra.mxu0 %v358
      %v710 = vpop.f32.mrf.mxu0
      %v711 = vadd.f32 %v670, %v710
      %712 = vmatmul.f32.gmra.mxu0 %v366
      %v713 = vpop.f32.mrf.mxu0
      %v714 = vadd.f32 %v673, %v713
      %715 = vmatmul.f32.gmra.mxu0 %v374
      %v716 = vpop.f32.mrf.mxu0
      %v717 = vadd.f32 %v676, %v716
      %718 = vmatmul.f32.gmra.mxu0 %v382
      %v719 = vpop.f32.mrf.mxu0
      %v720 = vadd.f32 %v679, %v719
      %721 = vmatmul.f32.gmra.mxu0 %v390
      %v722 = vpop.f32.mrf.mxu0
      %v723 = vadd.f32 %v682, %v722
      %724 = vmatmul.f32.gmra.mxu0 %v398
      %v725 = vpop.f32.mrf.mxu0
      %v726 = vadd.f32 %v685, %v725
      %727 = vmatmul.f32.gmra.mxu0 %v406
      %v728 = vpop.f32.mrf.mxu0
      %v729 = vadd.f32 %v688, %v728
      %730 = vmatmul.f32.gmra.mxu0 %v414
      %v731 = vpop.f32.mrf.mxu0
      %v732 = vadd.f32 %v691, %v731
      %733 = vdwg.mxu0
      %734 = vmatpush.msra.mxu0 %v499
      %735 = vmatpush.msra.mxu0 %v498
      %736 = vmatpush.msra.mxu0 %v497
      %737 = vmatpush.msra.mxu0 %v496
      %738 = vmatpush.msra.mxu0 %v495
      %739 = vmatpush.msra.mxu0 %v494
      %740 = vmatpush.msra.mxu0 %v493
      %741 = vmatpush.msra.mxu0 %v492
      %742 = vmatpush.msra.mxu0 %v491
      %743 = vmatpush.msra.mxu0 %v490
      %744 = vmatpush.msra.mxu0 %v489
      %745 = vmatpush.msra.mxu0 %v488
      %746 = vmatpush.msra.mxu0 %v487
      %747 = vmatpush.msra.mxu0 %v486
      %748 = vmatpush.msra.mxu0 %v485
      %749 = vmatpush.msra.mxu0 %v484
      %750 = vmatmul.f32.gmra.mxu0 %v359
      %v751 = vpop.f32.mrf.mxu0
      %v752 = vadd.f32 %v711, %v751
      %753 = vmatmul.f32.gmra.mxu0 %v367
      %v754 = vpop.f32.mrf.mxu0
      %v755 = vadd.f32 %v714, %v754
      %756 = vmatmul.f32.gmra.mxu0 %v375
      %v757 = vpop.f32.mrf.mxu0
      %v758 = vadd.f32 %v717, %v757
      %759 = vmatmul.f32.gmra.mxu0 %v383
      %v760 = vpop.f32.mrf.mxu0
      %v761 = vadd.f32 %v720, %v760
      %762 = vmatmul.f32.gmra.mxu0 %v391
      %v763 = vpop.f32.mrf.mxu0
      %v764 = vadd.f32 %v723, %v763
      %765 = vmatmul.f32.gmra.mxu0 %v399
      %v766 = vpop.f32.mrf.mxu0
      %v767 = vadd.f32 %v726, %v766
      %768 = vmatmul.f32.gmra.mxu0 %v407
      %v769 = vpop.f32.mrf.mxu0
      %v770 = vadd.f32 %v729, %v769
      %771 = vmatmul.f32.gmra.mxu0 %v415
      %v772 = vpop.f32.mrf.mxu0
      %v773 = vadd.f32 %v732, %v772
      %774 = vdwg.mxu0
      %775 = vmatpush.msra.mxu0 %v515
      %776 = vmatpush.msra.mxu0 %v514
      %777 = vmatpush.msra.mxu0 %v513
      %778 = vmatpush.msra.mxu0 %v512
      %779 = vmatpush.msra.mxu0 %v511
      %780 = vmatpush.msra.mxu0 %v510
      %781 = vmatpush.msra.mxu0 %v509
      %782 = vmatpush.msra.mxu0 %v508
      %783 = vmatpush.msra.mxu0 %v507
      %784 = vmatpush.msra.mxu0 %v506
      %785 = vmatpush.msra.mxu0 %v505
      %786 = vmatpush.msra.mxu0 %v504
      %787 = vmatpush.msra.mxu0 %v503
      %788 = vmatpush.msra.mxu0 %v502
      %789 = vmatpush.msra.mxu0 %v501
      %790 = vmatpush.msra.mxu0 %v500
      %791 = vmatmul.f32.gmra.mxu0 %v360
      %v792 = vpop.f32.mrf.mxu0
      %v793 = vadd.f32 %v752, %v792
      %794 = vmatmul.f32.gmra.mxu0 %v368
      %v795 = vpop.f32.mrf.mxu0
      %v796 = vadd.f32 %v755, %v795
      %797 = vmatmul.f32.gmra.mxu0 %v376
      %v798 = vpop.f32.mrf.mxu0
      %v799 = vadd.f32 %v758, %v798
      %800 = vmatmul.f32.gmra.mxu0 %v384
      %v801 = vpop.f32.mrf.mxu0
      %v802 = vadd.f32 %v761, %v801
      %803 = vmatmul.f32.gmra.mxu0 %v392
      %v804 = vpop.f32.mrf.mxu0
      %v805 = vadd.f32 %v764, %v804
      %806 = vmatmul.f32.gmra.mxu0 %v400
      %v807 = vpop.f32.mrf.mxu0
      %v808 = vadd.f32 %v767, %v807
      %809 = vmatmul.f32.gmra.mxu0 %v408
      %v810 = vpop.f32.mrf.mxu0
      %v811 = vadd.f32 %v770, %v810
      %812 = vmatmul.f32.gmra.mxu0 %v416
      %v813 = vpop.f32.mrf.mxu0
      %v814 = vadd.f32 %v773, %v813
      %815 = vdwg.mxu0
      %816 = vmatpush.msra.mxu0 %v531
      %817 = vmatpush.msra.mxu0 %v530
      %818 = vmatpush.msra.mxu0 %v529
      %819 = vmatpush.msra.mxu0 %v528
      %820 = vmatpush.msra.mxu0 %v527
      %821 = vmatpush.msra.mxu0 %v526
      %822 = vmatpush.msra.mxu0 %v525
      %823 = vmatpush.msra.mxu0 %v524
      %824 = vmatpush.msra.mxu0 %v523
      %825 = vmatpush.msra.mxu0 %v522
      %826 = vmatpush.msra.mxu0 %v521
      %827 = vmatpush.msra.mxu0 %v520
      %828 = vmatpush.msra.mxu0 %v519
      %829 = vmatpush.msra.mxu0 %v518
      %830 = vmatpush.msra.mxu0 %v517
      %831 = vmatpush.msra.mxu0 %v516
      %832 = vmatmul.f32.gmra.mxu0 %v361
      %v833 = vpop.f32.mrf.mxu0
      %v834 = vadd.f32 %v793, %v833
      %835 = vmatmul.f32.gmra.mxu0 %v369
      %v836 = vpop.f32.mrf.mxu0
      %v837 = vadd.f32 %v796, %v836
      %838 = vmatmul.f32.gmra.mxu0 %v377
      %v839 = vpop.f32.mrf.mxu0
      %v840 = vadd.f32 %v799, %v839
      %841 = vmatmul.f32.gmra.mxu0 %v385
      %v842 = vpop.f32.mrf.mxu0
      %v843 = vadd.f32 %v802, %v842
      %844 = vmatmul.f32.gmra.mxu0 %v393
      %v845 = vpop.f32.mrf.mxu0
      %v846 = vadd.f32 %v805, %v845
      %847 = vmatmul.f32.gmra.mxu0 %v401
      %v848 = vpop.f32.mrf.mxu0
      %v849 = vadd.f32 %v808, %v848
      %850 = vmatmul.f32.gmra.mxu0 %v409
      %v851 = vpop.f32.mrf.mxu0
      %v852 = vadd.f32 %v811, %v851
      %853 = vmatmul.f32.gmra.mxu0 %v417
      %v854 = vpop.f32.mrf.mxu0
      %v855 = vadd.f32 %v814, %v854
      %856 = vdwg.mxu0
      %857 = vmatpush.msra.mxu0 0.0
      %858 = vmatpush.msra.mxu0 0.0
      %859 = vmatpush.msra.mxu0 0.0
      %860 = vmatpush.msra.mxu0 %v544
      %861 = vmatpush.msra.mxu0 %v543
      %862 = vmatpush.msra.mxu0 %v542
      %863 = vmatpush.msra.mxu0 %v541
      %864 = vmatpush.msra.mxu0 %v540
      %865 = vmatpush.msra.mxu0 %v539
      %866 = vmatpush.msra.mxu0 %v538
      %867 = vmatpush.msra.mxu0 %v537
      %868 = vmatpush.msra.mxu0 %v536
      %869 = vmatpush.msra.mxu0 %v535
      %870 = vmatpush.msra.mxu0 %v534
      %871 = vmatpush.msra.mxu0 %v533
      %872 = vmatpush.msra.mxu0 %v532
      %873 = vmatmul.f32.gmra.mxu0 %v547
      %v874 = vpop.f32.mrf.mxu0
      %v875 = vadd.f32 %v834, %v874
      %876 = vmatmul.f32.gmra.mxu0 %v550
      %v877 = vpop.f32.mrf.mxu0
      %v878 = vadd.f32 %v837, %v877
      %879 = vmatmul.f32.gmra.mxu0 %v553
      %v880 = vpop.f32.mrf.mxu0
      %v881 = vadd.f32 %v840, %v880
      %882 = vmatmul.f32.gmra.mxu0 %v556
      %v883 = vpop.f32.mrf.mxu0
      %v884 = vadd.f32 %v843, %v883
      %885 = vmatmul.f32.gmra.mxu0 %v559
      %v886 = vpop.f32.mrf.mxu0
      %v887 = vadd.f32 %v846, %v886
      %888 = vmatmul.f32.gmra.mxu0 %v562
      %v889 = vpop.f32.mrf.mxu0
      %v890 = vadd.f32 %v849, %v889
      %891 = vmatmul.f32.gmra.mxu0 %v565
      %v892 = vpop.f32.mrf.mxu0
      %v893 = vadd.f32 %v852, %v892
      %894 = vmatmul.f32.gmra.mxu0 %v568
      %v895 = vpop.f32.mrf.mxu0
      %v896 = vadd.f32 %v855, %v895
      %897 = vdwg.mxu0
      %v898 = vmax.f32 %v875, 0.0
      %v899 = vmax.f32 %v878, 0.0
      %v900 = vmax.f32 %v881, 0.0
      %v901 = vmax.f32 %v884, 0.0
      %v902 = vmax.f32 %v887, 0.0
      %v903 = vmax.f32 %v890, 0.0
      %v904 = vmax.f32 %v893, 0.0
      %v905 = vmax.f32 %v896, 0.0
      %v906 = vld [vmem:[%s7 + $0x1] ss:$0 sm:$0xff]
      %v907 = vld [vmem:[%s2] sm:$0xff]
      %v908 = vld [vmem:[%s2 + $0x8] sm:$0xff]
      %v909 = vld [vmem:[%s2 + $0x10] sm:$0xff]
      %v910 = vld [vmem:[%s2 + $0x18] sm:$0xff]
      %v911 = vld [vmem:[%s2 + $0x20] sm:$0xff]
      %v912 = vld [vmem:[%s2 + $0x28] sm:$0xff]
      %v913 = vld [vmem:[%s2 + $0x30] sm:$0xff]
      %v914 = vld [vmem:[%s2 + $0x38] sm:$0xff]
      %vm915 = vcmask 523264
      %v917 = vsel %vm915, %v898, 0
      %v920 = vsel %vm915, %v899, 0
      %v923 = vsel %vm915, %v900, 0
      %v926 = vsel %vm915, %v901, 0
      %v929 = vsel %vm915, %v902, 0
      %v932 = vsel %vm915, %v903, 0
      %v935 = vsel %vm915, %v904, 0
      %v938 = vsel %vm915, %v905, 0
      %940 = vmatpush.msra.mxu0 0.0
      %941 = vmatpush.msra.mxu0 0.0
      %942 = vmatpush.msra.mxu0 0.0
      %943 = vmatpush.msra.mxu0 0.0
      %944 = vmatpush.msra.mxu0 0.0
      %945 = vmatpush.msra.mxu0 0.0
      %946 = vmatpush.msra.mxu0 0.0
      %947 = vmatpush.msra.mxu0 0.0
      %948 = vmatpush.msra.mxu0 %v914
      %949 = vmatpush.msra.mxu0 %v913
      %950 = vmatpush.msra.mxu0 %v912
      %951 = vmatpush.msra.mxu0 %v911
      %952 = vmatpush.msra.mxu0 %v910
      %953 = vmatpush.msra.mxu0 %v909
      %954 = vmatpush.msra.mxu0 %v908
      %955 = vmatpush.msra.mxu0 %v907
      %956 = vmatmul.f32.gmra.mxu0 %v917
      %v957 = vpop.f32.mrf.mxu0
      %v958 = vadd.f32 %v906, %v957
      %959 = vmatmul.f32.gmra.mxu0 %v920
      %v960 = vpop.f32.mrf.mxu0
      %v961 = vadd.f32 %v906, %v960
      %962 = vmatmul.f32.gmra.mxu0 %v923
      %v963 = vpop.f32.mrf.mxu0
      %v964 = vadd.f32 %v906, %v963
      %965 = vmatmul.f32.gmra.mxu0 %v926
      %v966 = vpop.f32.mrf.mxu0
      %v967 = vadd.f32 %v906, %v966
      %968 = vmatmul.f32.gmra.mxu0 %v929
      %v969 = vpop.f32.mrf.mxu0
      %v970 = vadd.f32 %v906, %v969
      %971 = vmatmul.f32.gmra.mxu0 %v932
      %v972 = vpop.f32.mrf.mxu0
      %v973 = vadd.f32 %v906, %v972
      %974 = vmatmul.f32.gmra.mxu0 %v935
      %v975 = vpop.f32.mrf.mxu0
      %v976 = vadd.f32 %v906, %v975
      %977 = vmatmul.f32.gmra.mxu0 %v938
      %v978 = vpop.f32.mrf.mxu0
      %v979 = vadd.f32 %v906, %v978
      %980 = vdwg.mxu0
      %v981 = vmax.f32 %v958, 0.0
      %v982 = vmax.f32 %v961, 0.0
      %v983 = vmax.f32 %v964, 0.0
      %v984 = vmax.f32 %v967, 0.0
      %v985 = vmax.f32 %v970, 0.0
      %v986 = vmax.f32 %v973, 0.0
      %v987 = vmax.f32 %v976, 0.0
      %v988 = vmax.f32 %v979, 0.0
      %v989 = vld [vmem:[%s7 + $0x2] ss:$0 sm:$0xff]
      %v990 = vld [vmem:[%s3] sm:$0xff]
      %v991 = vld [vmem:[%s3 + $0x8] sm:$0xff]
      %v992 = vld [vmem:[%s3 + $0x10] sm:$0xff]
      %v993 = vld [vmem:[%s3 + $0x18] sm:$0xff]
      %vm994 = vcmask 261120
      %v996 = vsel %vm994, %v981, 0
      %v999 = vsel %vm994, %v982, 0
      %v1002 = vsel %vm994, %v983, 0
      %v1005 = vsel %vm994, %v984, 0
      %v1008 = vsel %vm994, %v985, 0
      %v1011 = vsel %vm994, %v986, 0
      %v1014 = vsel %vm994, %v987, 0
      %v1017 = vsel %vm994, %v988, 0
      %1019 = vmatpush.msra.mxu0 0.0
      %1020 = vmatpush.msra.mxu0 0.0
      %1021 = vmatpush.msra.mxu0 0.0
      %1022 = vmatpush.msra.mxu0 0.0
      %1023 = vmatpush.msra.mxu0 0.0
      %1024 = vmatpush.msra.mxu0 0.0
      %1025 = vmatpush.msra.mxu0 0.0
      %1026 = vmatpush.msra.mxu0 0.0
      %1027 = vmatpush.msra.mxu0 0.0
      %1028 = vmatpush.msra.mxu0 0.0
      %1029 = vmatpush.msra.mxu0 0.0
      %1030 = vmatpush.msra.mxu0 0.0
      %1031 = vmatpush.msra.mxu0 %v993
      %1032 = vmatpush.msra.mxu0 %v992
      %1033 = vmatpush.msra.mxu0 %v991
      %1034 = vmatpush.msra.mxu0 %v990
      %1035 = vmatmul.f32.gmra.mxu0 %v996
      %v1036 = vpop.f32.mrf.mxu0
      %v1037 = vadd.f32 %v989, %v1036
      %1038 = vmatmul.f32.gmra.mxu0 %v999
      %v1039 = vpop.f32.mrf.mxu0
      %v1040 = vadd.f32 %v989, %v1039
      %1041 = vmatmul.f32.gmra.mxu0 %v1002
      %v1042 = vpop.f32.mrf.mxu0
      %v1043 = vadd.f32 %v989, %v1042
      %1044 = vmatmul.f32.gmra.mxu0 %v1005
      %v1045 = vpop.f32.mrf.mxu0
      %v1046 = vadd.f32 %v989, %v1045
      %1047 = vmatmul.f32.gmra.mxu0 %v1008
      %v1048 = vpop.f32.mrf.mxu0
      %v1049 = vadd.f32 %v989, %v1048
      %1050 = vmatmul.f32.gmra.mxu0 %v1011
      %v1051 = vpop.f32.mrf.mxu0
      %v1052 = vadd.f32 %v989, %v1051
      %1053 = vmatmul.f32.gmra.mxu0 %v1014
      %v1054 = vpop.f32.mrf.mxu0
      %v1055 = vadd.f32 %v989, %v1054
      %1056 = vmatmul.f32.gmra.mxu0 %v1017
      %v1057 = vpop.f32.mrf.mxu0
      %v1058 = vadd.f32 %v989, %v1057
      %1059 = vdwg.mxu0
      %1060 = vst [vmem:[%s353] sm:$0xff] %v1037
      %1061 = vst [vmem:[%s353 + $0x8] sm:$0xff] %v1040
      %1062 = vst [vmem:[%s353 + $0x10] sm:$0xff] %v1043
      %1063 = vst [vmem:[%s353 + $0x18] sm:$0xff] %v1046
      %1064 = vst [vmem:[%s353 + $0x20] sm:$0xff] %v1049
      %1065 = vst [vmem:[%s353 + $0x28] sm:$0xff] %v1052
      %1066 = vst [vmem:[%s353 + $0x30] sm:$0xff] %v1055
      %1067 = vst [vmem:[%s353 + $0x38] sm:$0xff] %v1058
      %v1068 = vld [vmem:[%s7 + $0x3] ss:$0 sm:$0xff]
      %v1069 = vld [vmem:[%s4] sm:$0xff]
      %v1070 = vld [vmem:[%s4 + $0x8] sm:$0xff]
      %v1071 = vld [vmem:[%s4 + $0x10] sm:$0xff]
      %v1072 = vld [vmem:[%s4 + $0x18] sm:$0xff]
      %v1073 = vld [vmem:[%s4 + $0x20] sm:$0xff]
      %v1074 = vld [vmem:[%s4 + $0x28] sm:$0xff]
      %v1075 = vld [vmem:[%s4 + $0x30] sm:$0xff]
      %v1076 = vld [vmem:[%s4 + $0x38] sm:$0xff]
      %v1077 = vld [vmem:[%s4 + $0x40] sm:$0xff]
      %v1078 = vld [vmem:[%s4 + $0x48] sm:$0xff]
      %v1079 = vld [vmem:[%s4 + $0x50] sm:$0xff]
      %v1080 = vld [vmem:[%s4 + $0x58] sm:$0xff]
      %v1081 = vld [vmem:[%s4 + $0x60] sm:$0xff]
      %v1082 = vld [vmem:[%s4 + $0x68] sm:$0xff]
      %v1083 = vld [vmem:[%s4 + $0x70] sm:$0xff]
      %v1084 = vld [vmem:[%s4 + $0x78] sm:$0xff]
      %1085 = vmatpush.msra.mxu0 %v1084
      %1086 = vmatpush.msra.mxu0 %v1083
      %1087 = vmatpush.msra.mxu0 %v1082
      %1088 = vmatpush.msra.mxu0 %v1081
      %1089 = vmatpush.msra.mxu0 %v1080
      %1090 = vmatpush.msra.mxu0 %v1079
      %1091 = vmatpush.msra.mxu0 %v1078
      %1092 = vmatpush.msra.mxu0 %v1077
      %1093 = vmatpush.msra.mxu0 %v1076
      %1094 = vmatpush.msra.mxu0 %v1075
      %1095 = vmatpush.msra.mxu0 %v1074
      %1096 = vmatpush.msra.mxu0 %v1073
      %1097 = vmatpush.msra.mxu0 %v1072
      %1098 = vmatpush.msra.mxu0 %v1071
      %1099 = vmatpush.msra.mxu0 %v1070
      %1100 = vmatpush.msra.mxu0 %v1069
      %1101 = vmatmul.f32.gmra.mxu0 %v1037
      %v1102 = vpop.f32.mrf.mxu0
      %v1103 = vadd.f32 %v1068, %v1102
      %1104 = vmatmul.f32.gmra.mxu0 %v1040
      %v1105 = vpop.f32.mrf.mxu0
      %v1106 = vadd.f32 %v1068, %v1105
      %1107 = vmatmul.f32.gmra.mxu0 %v1043
      %v1108 = vpop.f32.mrf.mxu0
      %v1109 = vadd.f32 %v1068, %v1108
      %1110 = vmatmul.f32.gmra.mxu0 %v1046
      %v1111 = vpop.f32.mrf.mxu0
      %v1112 = vadd.f32 %v1068, %v1111
      %1113 = vmatmul.f32.gmra.mxu0 %v1049
      %v1114 = vpop.f32.mrf.mxu0
      %v1115 = vadd.f32 %v1068, %v1114
      %1116 = vmatmul.f32.gmra.mxu0 %v1052
      %v1117 = vpop.f32.mrf.mxu0
      %v1118 = vadd.f32 %v1068, %v1117
      %1119 = vmatmul.f32.gmra.mxu0 %v1055
      %v1120 = vpop.f32.mrf.mxu0
      %v1121 = vadd.f32 %v1068, %v1120
      %1122 = vmatmul.f32.gmra.mxu0 %v1058
      %v1123 = vpop.f32.mrf.mxu0
      %v1124 = vadd.f32 %v1068, %v1123
      %1125 = vdwg.mxu0
      %v1126 = vmax.f32 %v1103, 0.0
      %v1127 = vmax.f32 %v1106, 0.0
      %v1128 = vmax.f32 %v1109, 0.0
      %v1129 = vmax.f32 %v1112, 0.0
      %v1130 = vmax.f32 %v1115, 0.0
      %v1131 = vmax.f32 %v1118, 0.0
      %v1132 = vmax.f32 %v1121, 0.0
      %v1133 = vmax.f32 %v1124, 0.0
      %v1134 = vld [vmem:[%s7 + $0x4] ss:$0 sm:$0xff]
      %v1135 = vld [vmem:[%s5] sm:$0xff]
      %v1136 = vld [vmem:[%s5 + $0x8] sm:$0xff]
      %v1137 = vld [vmem:[%s5 + $0x10] sm:$0xff]
      %v1138 = vld [vmem:[%s5 + $0x18] sm:$0xff]
      %v1140 = vsel %vm994, %v1126, 0
      %v1143 = vsel %vm994, %v1127, 0
      %v1146 = vsel %vm994, %v1128, 0
      %v1149 = vsel %vm994, %v1129, 0
      %v1152 = vsel %vm994, %v1130, 0
      %v1155 = vsel %vm994, %v1131, 0
      %v1158 = vsel %vm994, %v1132, 0
      %v1161 = vsel %vm994, %v1133, 0
      %1163 = vmatpush.msra.mxu0 0.0
      %1164 = vmatpush.msra.mxu0 0.0
      %1165 = vmatpush.msra.mxu0 0.0
      %1166 = vmatpush.msra.mxu0 0.0
      %1167 = vmatpush.msra.mxu0 0.0
      %1168 = vmatpush.msra.mxu0 0.0
      %1169 = vmatpush.msra.mxu0 0.0
      %1170 = vmatpush.msra.mxu0 0.0
      %1171 = vmatpush.msra.mxu0 0.0
      %1172 = vmatpush.msra.mxu0 0.0
      %1173 = vmatpush.msra.mxu0 0.0
      %1174 = vmatpush.msra.mxu0 0.0
      %1175 = vmatpush.msra.mxu0 %v1138
      %1176 = vmatpush.msra.mxu0 %v1137
      %1177 = vmatpush.msra.mxu0 %v1136
      %1178 = vmatpush.msra.mxu0 %v1135
      %1179 = vmatmul.f32.gmra.mxu0 %v1140
      %v1180 = vpop.f32.mrf.mxu0
      %v1181 = vadd.f32 %v1134, %v1180
      %1182 = vmatmul.f32.gmra.mxu0 %v1143
      %v1183 = vpop.f32.mrf.mxu0
      %v1184 = vadd.f32 %v1134, %v1183
      %1185 = vmatmul.f32.gmra.mxu0 %v1146
      %v1186 = vpop.f32.mrf.mxu0
      %v1187 = vadd.f32 %v1134, %v1186
      %1188 = vmatmul.f32.gmra.mxu0 %v1149
      %v1189 = vpop.f32.mrf.mxu0
      %v1190 = vadd.f32 %v1134, %v1189
      %1191 = vmatmul.f32.gmra.mxu0 %v1152
      %v1192 = vpop.f32.mrf.mxu0
      %v1193 = vadd.f32 %v1134, %v1192
      %1194 = vmatmul.f32.gmra.mxu0 %v1155
      %v1195 = vpop.f32.mrf.mxu0
      %v1196 = vadd.f32 %v1134, %v1195
      %1197 = vmatmul.f32.gmra.mxu0 %v1158
      %v1198 = vpop.f32.mrf.mxu0
      %v1199 = vadd.f32 %v1134, %v1198
      %1200 = vmatmul.f32.gmra.mxu0 %v1161
      %v1201 = vpop.f32.mrf.mxu0
      %v1202 = vadd.f32 %v1134, %v1201
      %1203 = vdwg.mxu0
      %v1204 = vmax.f32 %v1181, 0.0
      %v1205 = vmax.f32 %v1184, 0.0
      %v1206 = vmax.f32 %v1187, 0.0
      %v1207 = vmax.f32 %v1190, 0.0
      %v1208 = vmax.f32 %v1193, 0.0
      %v1209 = vmax.f32 %v1196, 0.0
      %v1210 = vmax.f32 %v1199, 0.0
      %v1211 = vmax.f32 %v1202, 0.0
      %s1212 = scalar_lea.vmem %s7, 5
      %v1213 = vld [vmem:[%s1212] ss:$8 sm:$0xf]
      %v1214 = vld [vmem:[%s1212] ss:$8 sm:$0xf0]
      %v1215 = vor.u32 %v1213, %v1214
      %v1216 = vld [vmem:[%s6] sm:$0xff]
      %v1217 = vld [vmem:[%s6 + $0x8] sm:$0xff]
      %v1218 = vld [vmem:[%s6 + $0x10] sm:$0xff]
      %v1219 = vld [vmem:[%s6 + $0x18] sm:$0xff]
      %v1220 = vld [vmem:[%s6 + $0x20] sm:$0xff]
      %v1221 = vld [vmem:[%s6 + $0x28] sm:$0xff]
      %v1222 = vld [vmem:[%s6 + $0x30] sm:$0xff]
      %v1223 = vld [vmem:[%s6 + $0x38] sm:$0xff]
      %v1224 = vld [vmem:[%s6 + $0x40] sm:$0xff]
      %v1225 = vld [vmem:[%s6 + $0x48] sm:$0xff]
      %v1226 = vld [vmem:[%s6 + $0x50] sm:$0xff]
      %v1227 = vld [vmem:[%s6 + $0x58] sm:$0xff]
      %v1228 = vld [vmem:[%s6 + $0x60] sm:$0xff]
      %v1229 = vld [vmem:[%s6 + $0x68] sm:$0xff]
      %v1230 = vld [vmem:[%s6 + $0x70] sm:$0xff]
      %v1231 = vld [vmem:[%s6 + $0x78] sm:$0xff]
      %v1232 = vld [vmem:[%s6 + $0x80] sm:$0xff]
      %v1233 = vld [vmem:[%s6 + $0x88] sm:$0xff]
      %v1234 = vld [vmem:[%s6 + $0x90] sm:$0xff]
      %v1235 = vld [vmem:[%s6 + $0x98] sm:$0xff]
      %v1236 = vld [vmem:[%s6 + $0xa0] sm:$0xff]
      %v1237 = vld [vmem:[%s6 + $0xa8] sm:$0xff]
      %v1238 = vld [vmem:[%s6 + $0xb0] sm:$0xff]
      %v1239 = vld [vmem:[%s6 + $0xb8] sm:$0xff]
      %v1240 = vld [vmem:[%s6 + $0xc0] sm:$0xff]
      %v1241 = vld [vmem:[%s6 + $0xc8] sm:$0xff]
      %v1242 = vld [vmem:[%s6 + $0xd0] sm:$0xff]
      %v1243 = vld [vmem:[%s6 + $0xd8] sm:$0xff]
      %v1244 = vld [vmem:[%s6 + $0xe0] sm:$0xff]
      %v1245 = vld [vmem:[%s6 + $0xe8] sm:$0xff]
      %v1246 = vld [vmem:[%s6 + $0xf0] sm:$0xff]
      %v1247 = vld [vmem:[%s6 + $0xf8] sm:$0xff]
      %v1248 = vld [vmem:[%s6 + $0x100] sm:$0xff]
      %v1249 = vld [vmem:[%s6 + $0x108] sm:$0xff]
      %v1250 = vld [vmem:[%s6 + $0x110] sm:$0xff]
      %v1251 = vld [vmem:[%s6 + $0x118] sm:$0xff]
      %v1252 = vld [vmem:[%s6 + $0x120] sm:$0xff]
      %v1253 = vld [vmem:[%s6 + $0x128] sm:$0xff]
      %v1254 = vld [vmem:[%s6 + $0x130] sm:$0xff]
      %v1255 = vld [vmem:[%s6 + $0x138] sm:$0xff]
      %v1256 = vld [vmem:[%s6 + $0x140] sm:$0xff]
      %v1257 = vld [vmem:[%s6 + $0x148] sm:$0xff]
      %v1258 = vld [vmem:[%s6 + $0x150] sm:$0xff]
      %v1259 = vld [vmem:[%s6 + $0x158] sm:$0xff]
      %v1260 = vld [vmem:[%s6 + $0x160] sm:$0xff]
      %v1261 = vld [vmem:[%s6 + $0x168] sm:$0xff]
      %v1262 = vld [vmem:[%s6 + $0x170] sm:$0xff]
      %v1263 = vld [vmem:[%s6 + $0x178] sm:$0xff]
      %v1264 = vld [vmem:[%s6 + $0x180] sm:$0xff]
      %v1265 = vld [vmem:[%s6 + $0x188] sm:$0xff]
      %v1266 = vld [vmem:[%s6 + $0x190] sm:$0xff]
      %v1267 = vld [vmem:[%s6 + $0x198] sm:$0xff]
      %v1268 = vld [vmem:[%s6 + $0x1a0] sm:$0xff]
      %v1269 = vld [vmem:[%s6 + $0x1a8] sm:$0xff]
      %v1270 = vld [vmem:[%s6 + $0x1b0] sm:$0xff]
      %v1271 = vld [vmem:[%s6 + $0x1b8] sm:$0xff]
      %v1272 = vld [vmem:[%s6 + $0x1c0] sm:$0xff]
      %v1273 = vld [vmem:[%s6 + $0x1c8] sm:$0xff]
      %v1274 = vld [vmem:[%s6 + $0x1d0] sm:$0xff]
      %v1275 = vld [vmem:[%s6 + $0x1d8] sm:$0xff]
      %v1276 = vld [vmem:[%s6 + $0x1e0] sm:$0xff]
      %v1277 = vld [vmem:[%s6 + $0x1e8] sm:$0xff]
      %v1278 = vld [vmem:[%s6 + $0x1f0] sm:$0xff]
      %v1279 = vld [vmem:[%s6 + $0x1f8] sm:$0xff]
      %v1281 = vperm.slane %v1215, 0
      %v1282 = vperm.slane %v1215, 1
      %v1283 = vperm.slane %v1215, 2
      %v1284 = vperm.slane %v1215, 3
      %v1285 = vperm.slane %v1215, 4
      %v1286 = vperm.slane %v1215, 5
      %v1287 = vperm.slane %v1215, 6
      %v1288 = vperm.slane %v1215, 7
      %v1298 = vsel %vm915, %v1204, 0
      %v1301 = vsel %vm915, %v1205, 0
      %v1304 = vsel %vm915, %v1206, 0
      %v1307 = vsel %vm915, %v1207, 0
      %v1310 = vsel %vm915, %v1208, 0
      %v1313 = vsel %vm915, %v1209, 0
      %v1316 = vsel %vm915, %v1210, 0
      %v1319 = vsel %vm915, %v1211, 0
      %1321 = vmatpush.msra.mxu0 0.0
      %1322 = vmatpush.msra.mxu0 0.0
      %1323 = vmatpush.msra.mxu0 0.0
      %1324 = vmatpush.msra.mxu0 0.0
      %1325 = vmatpush.msra.mxu0 0.0
      %1326 = vmatpush.msra.mxu0 0.0
      %1327 = vmatpush.msra.mxu0 0.0
      %1328 = vmatpush.msra.mxu0 0.0
      %1329 = vmatpush.msra.mxu0 %v1272
      %1330 = vmatpush.msra.mxu0 %v1264
      %1331 = vmatpush.msra.mxu0 %v1256
      %1332 = vmatpush.msra.mxu0 %v1248
      %1333 = vmatpush.msra.mxu0 %v1240
      %1334 = vmatpush.msra.mxu0 %v1232
      %1335 = vmatpush.msra.mxu0 %v1224
      %1336 = vmatpush.msra.mxu0 %v1216
      %1337 = vmatmul.f32.gmra.mxu0 %v1298
      %v1338 = vpop.f32.mrf.mxu0
      %v1339 = vadd.f32 %v1281, %v1338
      %1340 = vmatmul.f32.gmra.mxu0 %v1301
      %v1341 = vpop.f32.mrf.mxu0
      %v1342 = vadd.f32 %v1281, %v1341
      %1343 = vmatmul.f32.gmra.mxu0 %v1304
      %v1344 = vpop.f32.mrf.mxu0
      %v1345 = vadd.f32 %v1281, %v1344
      %1346 = vmatmul.f32.gmra.mxu0 %v1307
      %v1347 = vpop.f32.mrf.mxu0
      %v1348 = vadd.f32 %v1281, %v1347
      %1349 = vmatmul.f32.gmra.mxu0 %v1310
      %v1350 = vpop.f32.mrf.mxu0
      %v1351 = vadd.f32 %v1281, %v1350
      %1352 = vmatmul.f32.gmra.mxu0 %v1313
      %v1353 = vpop.f32.mrf.mxu0
      %v1354 = vadd.f32 %v1281, %v1353
      %1355 = vmatmul.f32.gmra.mxu0 %v1316
      %v1356 = vpop.f32.mrf.mxu0
      %v1357 = vadd.f32 %v1281, %v1356
      %1358 = vmatmul.f32.gmra.mxu0 %v1319
      %v1359 = vpop.f32.mrf.mxu0
      %v1360 = vadd.f32 %v1281, %v1359
      %1361 = vdwg.mxu0
      %1362 = vmatpush.msra.mxu0 0.0
      %1363 = vmatpush.msra.mxu0 0.0
      %1364 = vmatpush.msra.mxu0 0.0
      %1365 = vmatpush.msra.mxu0 0.0
      %1366 = vmatpush.msra.mxu0 0.0
      %1367 = vmatpush.msra.mxu0 0.0
      %1368 = vmatpush.msra.mxu0 0.0
      %1369 = vmatpush.msra.mxu0 0.0
      %1370 = vmatpush.msra.mxu0 %v1273
      %1371 = vmatpush.msra.mxu0 %v1265
      %1372 = vmatpush.msra.mxu0 %v1257
      %1373 = vmatpush.msra.mxu0 %v1249
      %1374 = vmatpush.msra.mxu0 %v1241
      %1375 = vmatpush.msra.mxu0 %v1233
      %1376 = vmatpush.msra.mxu0 %v1225
      %1377 = vmatpush.msra.mxu0 %v1217
      %1378 = vmatmul.f32.gmra.mxu0 %v1298
      %v1379 = vpop.f32.mrf.mxu0
      %v1380 = vadd.f32 %v1282, %v1379
      %1381 = vmatmul.f32.gmra.mxu0 %v1301
      %v1382 = vpop.f32.mrf.mxu0
      %v1383 = vadd.f32 %v1282, %v1382
      %1384 = vmatmul.f32.gmra.mxu0 %v1304
      %v1385 = vpop.f32.mrf.mxu0
      %v1386 = vadd.f32 %v1282, %v1385
      %1387 = vmatmul.f32.gmra.mxu0 %v1307
      %v1388 = vpop.f32.mrf.mxu0
      %v1389 = vadd.f32 %v1282, %v1388
      %1390 = vmatmul.f32.gmra.mxu0 %v1310
      %v1391 = vpop.f32.mrf.mxu0
      %v1392 = vadd.f32 %v1282, %v1391
      %1393 = vmatmul.f32.gmra.mxu0 %v1313
      %v1394 = vpop.f32.mrf.mxu0
      %v1395 = vadd.f32 %v1282, %v1394
      %1396 = vmatmul.f32.gmra.mxu0 %v1316
      %v1397 = vpop.f32.mrf.mxu0
      %v1398 = vadd.f32 %v1282, %v1397
      %1399 = vmatmul.f32.gmra.mxu0 %v1319
      %v1400 = vpop.f32.mrf.mxu0
      %v1401 = vadd.f32 %v1282, %v1400
      %1402 = vdwg.mxu0
      %1403 = vmatpush.msra.mxu0 0.0
      %1404 = vmatpush.msra.mxu0 0.0
      %1405 = vmatpush.msra.mxu0 0.0
      %1406 = vmatpush.msra.mxu0 0.0
      %1407 = vmatpush.msra.mxu0 0.0
      %1408 = vmatpush.msra.mxu0 0.0
      %1409 = vmatpush.msra.mxu0 0.0
      %1410 = vmatpush.msra.mxu0 0.0
      %1411 = vmatpush.msra.mxu0 %v1274
      %1412 = vmatpush.msra.mxu0 %v1266
      %1413 = vmatpush.msra.mxu0 %v1258
      %1414 = vmatpush.msra.mxu0 %v1250
      %1415 = vmatpush.msra.mxu0 %v1242
      %1416 = vmatpush.msra.mxu0 %v1234
      %1417 = vmatpush.msra.mxu0 %v1226
      %1418 = vmatpush.msra.mxu0 %v1218
      %1419 = vmatmul.f32.gmra.mxu0 %v1298
      %v1420 = vpop.f32.mrf.mxu0
      %v1421 = vadd.f32 %v1283, %v1420
      %1422 = vmatmul.f32.gmra.mxu0 %v1301
      %v1423 = vpop.f32.mrf.mxu0
      %v1424 = vadd.f32 %v1283, %v1423
      %1425 = vmatmul.f32.gmra.mxu0 %v1304
      %v1426 = vpop.f32.mrf.mxu0
      %v1427 = vadd.f32 %v1283, %v1426
      %1428 = vmatmul.f32.gmra.mxu0 %v1307
      %v1429 = vpop.f32.mrf.mxu0
      %v1430 = vadd.f32 %v1283, %v1429
      %1431 = vmatmul.f32.gmra.mxu0 %v1310
      %v1432 = vpop.f32.mrf.mxu0
      %v1433 = vadd.f32 %v1283, %v1432
      %1434 = vmatmul.f32.gmra.mxu0 %v1313
      %v1435 = vpop.f32.mrf.mxu0
      %v1436 = vadd.f32 %v1283, %v1435
      %1437 = vmatmul.f32.gmra.mxu0 %v1316
      %v1438 = vpop.f32.mrf.mxu0
      %v1439 = vadd.f32 %v1283, %v1438
      %1440 = vmatmul.f32.gmra.mxu0 %v1319
      %v1441 = vpop.f32.mrf.mxu0
      %v1442 = vadd.f32 %v1283, %v1441
      %1443 = vdwg.mxu0
      %1444 = vmatpush.msra.mxu0 0.0
      %1445 = vmatpush.msra.mxu0 0.0
      %1446 = vmatpush.msra.mxu0 0.0
      %1447 = vmatpush.msra.mxu0 0.0
      %1448 = vmatpush.msra.mxu0 0.0
      %1449 = vmatpush.msra.mxu0 0.0
      %1450 = vmatpush.msra.mxu0 0.0
      %1451 = vmatpush.msra.mxu0 0.0
      %1452 = vmatpush.msra.mxu0 %v1275
      %1453 = vmatpush.msra.mxu0 %v1267
      %1454 = vmatpush.msra.mxu0 %v1259
      %1455 = vmatpush.msra.mxu0 %v1251
      %1456 = vmatpush.msra.mxu0 %v1243
      %1457 = vmatpush.msra.mxu0 %v1235
      %1458 = vmatpush.msra.mxu0 %v1227
      %1459 = vmatpush.msra.mxu0 %v1219
      %1460 = vmatmul.f32.gmra.mxu0 %v1298
      %v1461 = vpop.f32.mrf.mxu0
      %v1462 = vadd.f32 %v1284, %v1461
      %1463 = vmatmul.f32.gmra.mxu0 %v1301
      %v1464 = vpop.f32.mrf.mxu0
      %v1465 = vadd.f32 %v1284, %v1464
      %1466 = vmatmul.f32.gmra.mxu0 %v1304
      %v1467 = vpop.f32.mrf.mxu0
      %v1468 = vadd.f32 %v1284, %v1467
      %1469 = vmatmul.f32.gmra.mxu0 %v1307
      %v1470 = vpop.f32.mrf.mxu0
      %v1471 = vadd.f32 %v1284, %v1470
      %1472 = vmatmul.f32.gmra.mxu0 %v1310
      %v1473 = vpop.f32.mrf.mxu0
      %v1474 = vadd.f32 %v1284, %v1473
      %1475 = vmatmul.f32.gmra.mxu0 %v1313
      %v1476 = vpop.f32.mrf.mxu0
      %v1477 = vadd.f32 %v1284, %v1476
      %1478 = vmatmul.f32.gmra.mxu0 %v1316
      %v1479 = vpop.f32.mrf.mxu0
      %v1480 = vadd.f32 %v1284, %v1479
      %1481 = vmatmul.f32.gmra.mxu0 %v1319
      %v1482 = vpop.f32.mrf.mxu0
      %v1483 = vadd.f32 %v1284, %v1482
      %1484 = vdwg.mxu0
      %1485 = vmatpush.msra.mxu0 0.0
      %1486 = vmatpush.msra.mxu0 0.0
      %1487 = vmatpush.msra.mxu0 0.0
      %1488 = vmatpush.msra.mxu0 0.0
      %1489 = vmatpush.msra.mxu0 0.0
      %1490 = vmatpush.msra.mxu0 0.0
      %1491 = vmatpush.msra.mxu0 0.0
      %1492 = vmatpush.msra.mxu0 0.0
      %1493 = vmatpush.msra.mxu0 %v1276
      %1494 = vmatpush.msra.mxu0 %v1268
      %1495 = vmatpush.msra.mxu0 %v1260
      %1496 = vmatpush.msra.mxu0 %v1252
      %1497 = vmatpush.msra.mxu0 %v1244
      %1498 = vmatpush.msra.mxu0 %v1236
      %1499 = vmatpush.msra.mxu0 %v1228
      %1500 = vmatpush.msra.mxu0 %v1220
      %1501 = vmatmul.f32.gmra.mxu0 %v1298
      %v1502 = vpop.f32.mrf.mxu0
      %v1503 = vadd.f32 %v1285, %v1502
      %1504 = vmatmul.f32.gmra.mxu0 %v1301
      %v1505 = vpop.f32.mrf.mxu0
      %v1506 = vadd.f32 %v1285, %v1505
      %1507 = vmatmul.f32.gmra.mxu0 %v1304
      %v1508 = vpop.f32.mrf.mxu0
      %v1509 = vadd.f32 %v1285, %v1508
      %1510 = vmatmul.f32.gmra.mxu0 %v1307
      %v1511 = vpop.f32.mrf.mxu0
      %v1512 = vadd.f32 %v1285, %v1511
      %1513 = vmatmul.f32.gmra.mxu0 %v1310
      %v1514 = vpop.f32.mrf.mxu0
      %v1515 = vadd.f32 %v1285, %v1514
      %1516 = vmatmul.f32.gmra.mxu0 %v1313
      %v1517 = vpop.f32.mrf.mxu0
      %v1518 = vadd.f32 %v1285, %v1517
      %1519 = vmatmul.f32.gmra.mxu0 %v1316
      %v1520 = vpop.f32.mrf.mxu0
      %v1521 = vadd.f32 %v1285, %v1520
      %1522 = vmatmul.f32.gmra.mxu0 %v1319
      %v1523 = vpop.f32.mrf.mxu0
      %v1524 = vadd.f32 %v1285, %v1523
      %1525 = vdwg.mxu0
      %1526 = vmatpush.msra.mxu0 0.0
      %1527 = vmatpush.msra.mxu0 0.0
      %1528 = vmatpush.msra.mxu0 0.0
      %1529 = vmatpush.msra.mxu0 0.0
      %1530 = vmatpush.msra.mxu0 0.0
      %1531 = vmatpush.msra.mxu0 0.0
      %1532 = vmatpush.msra.mxu0 0.0
      %1533 = vmatpush.msra.mxu0 0.0
      %1534 = vmatpush.msra.mxu0 %v1277
      %1535 = vmatpush.msra.mxu0 %v1269
      %1536 = vmatpush.msra.mxu0 %v1261
      %1537 = vmatpush.msra.mxu0 %v1253
      %1538 = vmatpush.msra.mxu0 %v1245
      %1539 = vmatpush.msra.mxu0 %v1237
      %1540 = vmatpush.msra.mxu0 %v1229
      %1541 = vmatpush.msra.mxu0 %v1221
      %1542 = vmatmul.f32.gmra.mxu0 %v1298
      %v1543 = vpop.f32.mrf.mxu0
      %v1544 = vadd.f32 %v1286, %v1543
      %1545 = vmatmul.f32.gmra.mxu0 %v1301
      %v1546 = vpop.f32.mrf.mxu0
      %v1547 = vadd.f32 %v1286, %v1546
      %1548 = vmatmul.f32.gmra.mxu0 %v1304
      %v1549 = vpop.f32.mrf.mxu0
      %v1550 = vadd.f32 %v1286, %v1549
      %1551 = vmatmul.f32.gmra.mxu0 %v1307
      %v1552 = vpop.f32.mrf.mxu0
      %v1553 = vadd.f32 %v1286, %v1552
      %1554 = vmatmul.f32.gmra.mxu0 %v1310
      %v1555 = vpop.f32.mrf.mxu0
      %v1556 = vadd.f32 %v1286, %v1555
      %1557 = vmatmul.f32.gmra.mxu0 %v1313
      %v1558 = vpop.f32.mrf.mxu0
      %v1559 = vadd.f32 %v1286, %v1558
      %1560 = vmatmul.f32.gmra.mxu0 %v1316
      %v1561 = vpop.f32.mrf.mxu0
      %v1562 = vadd.f32 %v1286, %v1561
      %1563 = vmatmul.f32.gmra.mxu0 %v1319
      %v1564 = vpop.f32.mrf.mxu0
      %v1565 = vadd.f32 %v1286, %v1564
      %1566 = vdwg.mxu0
      %1567 = vmatpush.msra.mxu0 0.0
      %1568 = vmatpush.msra.mxu0 0.0
      %1569 = vmatpush.msra.mxu0 0.0
      %1570 = vmatpush.msra.mxu0 0.0
      %1571 = vmatpush.msra.mxu0 0.0
      %1572 = vmatpush.msra.mxu0 0.0
      %1573 = vmatpush.msra.mxu0 0.0
      %1574 = vmatpush.msra.mxu0 0.0
      %1575 = vmatpush.msra.mxu0 %v1278
      %1576 = vmatpush.msra.mxu0 %v1270
      %1577 = vmatpush.msra.mxu0 %v1262
      %1578 = vmatpush.msra.mxu0 %v1254
      %1579 = vmatpush.msra.mxu0 %v1246
      %1580 = vmatpush.msra.mxu0 %v1238
      %1581 = vmatpush.msra.mxu0 %v1230
      %1582 = vmatpush.msra.mxu0 %v1222
      %1583 = vmatmul.f32.gmra.mxu0 %v1298
      %v1584 = vpop.f32.mrf.mxu0
      %v1585 = vadd.f32 %v1287, %v1584
      %1586 = vmatmul.f32.gmra.mxu0 %v1301
      %v1587 = vpop.f32.mrf.mxu0
      %v1588 = vadd.f32 %v1287, %v1587
      %1589 = vmatmul.f32.gmra.mxu0 %v1304
      %v1590 = vpop.f32.mrf.mxu0
      %v1591 = vadd.f32 %v1287, %v1590
      %1592 = vmatmul.f32.gmra.mxu0 %v1307
      %v1593 = vpop.f32.mrf.mxu0
      %v1594 = vadd.f32 %v1287, %v1593
      %1595 = vmatmul.f32.gmra.mxu0 %v1310
      %v1596 = vpop.f32.mrf.mxu0
      %v1597 = vadd.f32 %v1287, %v1596
      %1598 = vmatmul.f32.gmra.mxu0 %v1313
      %v1599 = vpop.f32.mrf.mxu0
      %v1600 = vadd.f32 %v1287, %v1599
      %1601 = vmatmul.f32.gmra.mxu0 %v1316
      %v1602 = vpop.f32.mrf.mxu0
      %v1603 = vadd.f32 %v1287, %v1602
      %1604 = vmatmul.f32.gmra.mxu0 %v1319
      %v1605 = vpop.f32.mrf.mxu0
      %v1606 = vadd.f32 %v1287, %v1605
      %1607 = vdwg.mxu0
      %1608 = vmatpush.msra.mxu0 0.0
      %1609 = vmatpush.msra.mxu0 0.0
      %1610 = vmatpush.msra.mxu0 0.0
      %1611 = vmatpush.msra.mxu0 0.0
      %1612 = vmatpush.msra.mxu0 0.0
      %1613 = vmatpush.msra.mxu0 0.0
      %1614 = vmatpush.msra.mxu0 0.0
      %1615 = vmatpush.msra.mxu0 0.0
      %1616 = vmatpush.msra.mxu0 %v1279
      %1617 = vmatpush.msra.mxu0 %v1271
      %1618 = vmatpush.msra.mxu0 %v1263
      %1619 = vmatpush.msra.mxu0 %v1255
      %1620 = vmatpush.msra.mxu0 %v1247
      %1621 = vmatpush.msra.mxu0 %v1239
      %1622 = vmatpush.msra.mxu0 %v1231
      %1623 = vmatpush.msra.mxu0 %v1223
      %1624 = vmatmul.f32.gmra.mxu0 %v1298
      %v1625 = vpop.f32.mrf.mxu0
      %v1626 = vadd.f32 %v1288, %v1625
      %1627 = vmatmul.f32.gmra.mxu0 %v1301
      %v1628 = vpop.f32.mrf.mxu0
      %v1629 = vadd.f32 %v1288, %v1628
      %1630 = vmatmul.f32.gmra.mxu0 %v1304
      %v1631 = vpop.f32.mrf.mxu0
      %v1632 = vadd.f32 %v1288, %v1631
      %1633 = vmatmul.f32.gmra.mxu0 %v1307
      %v1634 = vpop.f32.mrf.mxu0
      %v1635 = vadd.f32 %v1288, %v1634
      %1636 = vmatmul.f32.gmra.mxu0 %v1310
      %v1637 = vpop.f32.mrf.mxu0
      %v1638 = vadd.f32 %v1288, %v1637
      %1639 = vmatmul.f32.gmra.mxu0 %v1313
      %v1640 = vpop.f32.mrf.mxu0
      %v1641 = vadd.f32 %v1288, %v1640
      %1642 = vmatmul.f32.gmra.mxu0 %v1316
      %v1643 = vpop.f32.mrf.mxu0
      %v1644 = vadd.f32 %v1288, %v1643
      %1645 = vmatmul.f32.gmra.mxu0 %v1319
      %v1646 = vpop.f32.mrf.mxu0
      %v1647 = vadd.f32 %v1288, %v1646
      %1648 = vdwg.mxu0
      %1649 = vst [vmem:[%s347] sm:$0xff] %v1339
      %1650 = vst [vmem:[%s347 + $0x8] sm:$0xff] %v1380
      %1651 = vst [vmem:[%s347 + $0x10] sm:$0xff] %v1421
      %1652 = vst [vmem:[%s347 + $0x18] sm:$0xff] %v1462
      %1653 = vst [vmem:[%s347 + $0x20] sm:$0xff] %v1503
      %1654 = vst [vmem:[%s347 + $0x28] sm:$0xff] %v1544
      %1655 = vst [vmem:[%s347 + $0x30] sm:$0xff] %v1585
      %1656 = vst.msk [vmem:[%s347 + $0x38] sm:$0xff] %vm545, %v1626
      %1657 = vst [vmem:[%s347 + $0x40] sm:$0xff] %v1342
      %1658 = vst [vmem:[%s347 + $0x48] sm:$0xff] %v1383
      %1659 = vst [vmem:[%s347 + $0x50] sm:$0xff] %v1424
      %1660 = vst [vmem:[%s347 + $0x58] sm:$0xff] %v1465
      %1661 = vst [vmem:[%s347 + $0x60] sm:$0xff] %v1506
      %1662 = vst [vmem:[%s347 + $0x68] sm:$0xff] %v1547
      %1663 = vst [vmem:[%s347 + $0x70] sm:$0xff] %v1588
      %1664 = vst.msk [vmem:[%s347 + $0x78] sm:$0xff] %vm545, %v1629
      %1665 = vst [vmem:[%s347 + $0x80] sm:$0xff] %v1345
      %1666 = vst [vmem:[%s347 + $0x88] sm:$0xff] %v1386
      %1667 = vst [vmem:[%s347 + $0x90] sm:$0xff] %v1427
      %1668 = vst [vmem:[%s347 + $0x98] sm:$0xff] %v1468
      %1669 = vst [vmem:[%s347 + $0xa0] sm:$0xff] %v1509
      %1670 = vst [vmem:[%s347 + $0xa8] sm:$0xff] %v1550
      %1671 = vst [vmem:[%s347 + $0xb0] sm:$0xff] %v1591
      %1672 = vst.msk [vmem:[%s347 + $0xb8] sm:$0xff] %vm545, %v1632
      %1673 = vst [vmem:[%s347 + $0xc0] sm:$0xff] %v1348
      %1674 = vst [vmem:[%s347 + $0xc8] sm:$0xff] %v1389
      %1675 = vst [vmem:[%s347 + $0xd0] sm:$0xff] %v1430
      %1676 = vst [vmem:[%s347 + $0xd8] sm:$0xff] %v1471
      %1677 = vst [vmem:[%s347 + $0xe0] sm:$0xff] %v1512
      %1678 = vst [vmem:[%s347 + $0xe8] sm:$0xff] %v1553
      %1679 = vst [vmem:[%s347 + $0xf0] sm:$0xff] %v1594
      %1680 = vst.msk [vmem:[%s347 + $0xf8] sm:$0xff] %vm545, %v1635
      %1681 = vst [vmem:[%s347 + $0x100] sm:$0xff] %v1351
      %1682 = vst [vmem:[%s347 + $0x108] sm:$0xff] %v1392
      %1683 = vst [vmem:[%s347 + $0x110] sm:$0xff] %v1433
      %1684 = vst [vmem:[%s347 + $0x118] sm:$0xff] %v1474
      %1685 = vst [vmem:[%s347 + $0x120] sm:$0xff] %v1515
      %1686 = vst [vmem:[%s347 + $0x128] sm:$0xff] %v1556
      %1687 = vst [vmem:[%s347 + $0x130] sm:$0xff] %v1597
      %1688 = vst.msk [vmem:[%s347 + $0x138] sm:$0xff] %vm545, %v1638
      %1689 = vst [vmem:[%s347 + $0x140] sm:$0xff] %v1354
      %1690 = vst [vmem:[%s347 + $0x148] sm:$0xff] %v1395
      %1691 = vst [vmem:[%s347 + $0x150] sm:$0xff] %v1436
      %1692 = vst [vmem:[%s347 + $0x158] sm:$0xff] %v1477
      %1693 = vst [vmem:[%s347 + $0x160] sm:$0xff] %v1518
      %1694 = vst [vmem:[%s347 + $0x168] sm:$0xff] %v1559
      %1695 = vst [vmem:[%s347 + $0x170] sm:$0xff] %v1600
      %1696 = vst.msk [vmem:[%s347 + $0x178] sm:$0xff] %vm545, %v1641
      %1697 = vst [vmem:[%s347 + $0x180] sm:$0xff] %v1357
      %1698 = vst [vmem:[%s347 + $0x188] sm:$0xff] %v1398
      %1699 = vst [vmem:[%s347 + $0x190] sm:$0xff] %v1439
      %1700 = vst [vmem:[%s347 + $0x198] sm:$0xff] %v1480
      %1701 = vst [vmem:[%s347 + $0x1a0] sm:$0xff] %v1521
      %1702 = vst [vmem:[%s347 + $0x1a8] sm:$0xff] %v1562
      %1703 = vst [vmem:[%s347 + $0x1b0] sm:$0xff] %v1603
      %1704 = vst.msk [vmem:[%s347 + $0x1b8] sm:$0xff] %vm545, %v1644
      %1705 = vst [vmem:[%s347 + $0x1c0] sm:$0xff] %v1360
      %1706 = vst [vmem:[%s347 + $0x1c8] sm:$0xff] %v1401
      %1707 = vst [vmem:[%s347 + $0x1d0] sm:$0xff] %v1442
      %1708 = vst [vmem:[%s347 + $0x1d8] sm:$0xff] %v1483
      %1709 = vst [vmem:[%s347 + $0x1e0] sm:$0xff] %v1524
      %1710 = vst [vmem:[%s347 + $0x1e8] sm:$0xff] %v1565
      %1711 = vst [vmem:[%s347 + $0x1f0] sm:$0xff] %v1606
      %1712 = vst.msk [vmem:[%s347 + $0x1f8] sm:$0xff] %vm545, %v1647
      %s1713 = smul.u32 8, %s21
      %p1714 = scmp.lt.s32.totalorder %s1713, 31
      %s1715 = scalar_select %p1714, %s1713, 31
      %s1716 = smul.addr %s1715, 8
      %s1717 = smul.addr %s1716, 8
      %s1718 = scalar_lea.vmem %s8, %s1717
      %s1719 = smul.u32 8, %s21
      %p1720 = scmp.lt.s32.totalorder %s1719, 31
      %s1721 = scalar_select %p1720, %s1719, 31
      %s1722 = smul.addr %s1721, 8
      %s1723 = scalar_lea.vmem %s9, %s1722
      // Predicated region
      $region53: #{autoencoder_forward.1} parent=51 // pred_check
        %p1724 = pneg %p212
      $region54: #{autoencoder_forward.1} parent=51 // pred_check_branch
        %1726 = sbr.rel (%p1724) target = $region56
      $region55: #{autoencoder_forward.1} parent=51 // pred_region
        %s1727 = smul.u32 8, %s21
      $region56: #{autoencoder_forward.1} parent=51 // pred_fallthru
        _
      // Predicated region
      $region57: #{autoencoder_forward.1} parent=51 // pred_check
        %p1728 = pneg %p238
      $region58: #{autoencoder_forward.1} parent=51 // pred_check_branch
        %1730 = sbr.rel (%p1728) target = $region60
      $region59: #{autoencoder_forward.1} parent=51 // pred_region
        %s1731 = smul.u32 8, %s21
      $region60: #{autoencoder_forward.1} parent=51 // pred_fallthru
        _
    $region52: #{autoencoder_forward.1} parent=5 // pred_fallthru
      _
    %p1732 = scmp.le.s32.totalorder 2, %s16
    // Predicated region
    $region61: #{autoencoder_forward.1} parent=5 // pred_check
      %p1733 = pneg %p1732
    $region62: #{autoencoder_forward.1} parent=5 // pred_check_branch
      %1735 = sbr.rel (%p1733) target = $region64
    $region63: #{autoencoder_forward.1} parent=5 // pred_region
      %s1736 = ssub.s32 %s16, 2
      // Predicated region
      $region65: #{autoencoder_forward.1} parent=63 // pred_check
        %p1737 = pneg %p218
      $region66: #{autoencoder_forward.1} parent=63 // pred_check_branch
        %1739 = sbr.rel (%p1737) target = $region68
      $region67: #{autoencoder_forward.1} parent=63 // pred_region
        %s1740 = smul.u32 8, %s22
        %p1741 = scmp.lt.s32.totalorder %s1740, 31
        %s1742 = scalar_select %p1741, %s1740, 31
        %s1743 = smul.addr %s1742, 8
        %s1744 = smul.addr %s1743, 8
        %s1745 = scalar_lea.vmem %s8, %s1744
      $region68: #{autoencoder_forward.1} parent=63 // pred_fallthru
        _
      // Predicated region
      $region69: #{autoencoder_forward.1} parent=63 // pred_check
        %p1746 = pneg %p244
      $region70: #{autoencoder_forward.1} parent=63 // pred_check_branch
        %1748 = sbr.rel (%p1746) target = $region72
      $region71: #{autoencoder_forward.1} parent=63 // pred_region
        %s1749 = smul.u32 8, %s22
        %p1750 = scmp.lt.s32.totalorder %s1749, 31
        %s1751 = scalar_select %p1750, %s1749, 31
        %s1752 = smul.addr %s1751, 8
        %s1753 = scalar_lea.vmem %s9, %s1752
      $region72: #{autoencoder_forward.1} parent=63 // pred_fallthru
        _
    $region64: #{autoencoder_forward.1} parent=5 // pred_fallthru
      _
  $region6: #{autoencoder_forward.1} parent=0 // loop_footer
    %s20 = sadd.s32 1, %s16
  $region7: #{autoencoder_forward.1} parent=0 // loop_footer_branch
    %15 = sbr.rel target = $region3
  $region8: #{autoencoder_forward.1} parent=0 // loop_exit
    _

</llo_original>
